<compile_context>
chip_gen: v7x
topology: tpu7x:2x2x1
jax: 0.10.0
libtpu: 0.0.40
codegen_flags: <defaults>
</compile_context>

<pallas_src>
import functools

import numpy as np
import jax
import jax.numpy as jnp
from jax.experimental import pallas as pl
from jax.experimental.pallas import tpu as pltpu

HIDDEN = 32
NUM_HIDDEN = 2
FUSED = 3 * HIDDEN         # 96 fused hidden width
OUT13 = 4 + 4 + 6          # fused output width: net1(4) | net2(4) | net3(6)
EPS = 1e-5                 # PyTorch BatchNorm1d default eps


def _gelu(x, exact=True):
    if exact:
        # torch.nn.GELU() default: exact erf-based GELU
        return 0.5 * x * (1.0 + jax.lax.erf(x * (1.0 / np.sqrt(2.0))))
    # tanh approximation fallback (only used if erf fails to lower)
    c = np.sqrt(2.0 / np.pi)
    return 0.5 * x * (1.0 + jnp.tanh(c * (x + 0.044715 * x * x * x)))


def _masked_bn(h, mask, inv_n):
    """Training-mode BatchNorm1d (affine folded out). Masked one-pass stats."""
    hm = h * mask
    mean = jnp.sum(hm, axis=0, keepdims=True) * inv_n
    meansq = jnp.sum(hm * h, axis=0, keepdims=True) * inv_n
    var = meansq - mean * mean
    return (h - mean) * jax.lax.rsqrt(var + EPS)


def _viscosity_kernel(n_ref, x_ref, w0_ref, wh_ref, wo_ref, bias_ref, out_ref,
                      *, exact_gelu):
    x = x_ref[...]                                   # (Np, 100) f32
    n_pad = x.shape[0]

    n_valid = n_ref[0]
    inv_n = 1.0 / n_valid.astype(jnp.float32)
    row = jax.lax.broadcasted_iota(jnp.int32, (n_pad, 1), 0)
    mask = (row < n_valid).astype(jnp.float32)       # (Np, 1) valid-row mask

    # Shared affine-free input BN over all 100 columns (per-column stats are
    # identical regardless of which subnet consumes them).
    xn = _masked_bn(x, mask, inv_n)                  # (Np, 100)

    # Fused first layer: (Np,100) @ (100,96)
    h = jnp.dot(xn, w0_ref[...], preferred_element_type=jnp.float32) \
        + bias_ref[0:1, :]
    h = _masked_bn(_gelu(h, exact_gelu), mask, inv_n)

    # Fused block-diagonal hidden layers (BN affine already folded into W/b).
    for i in range(NUM_HIDDEN):
        wi = wh_ref[i * FUSED:(i + 1) * FUSED, :]    # static slice, zero-cost view
        h = jnp.dot(h, wi, preferred_element_type=jnp.float32) \
            + bias_ref[i + 1:i + 2, :]
        h = _masked_bn(_gelu(h, exact_gelu), mask, inv_n)

    # Fused output layer: (Np,96) @ (96,14) -> [out1(4) | out2(4) | out3(6)]
    o = jnp.dot(h, wo_ref[...], preferred_element_type=jnp.float32) \
        + bias_ref[3:4, 0:OUT13]

    out1 = o[:, 0:4]
    out2 = o[:, 4:8]

    # One masked batch-mean over out3's 6 columns, sliced afterwards.
    m3 = jnp.sum(o[:, 8:14] * mask, axis=0, keepdims=True) * inv_n   # (1, 6)
    beta_mean = m3[:, 0:1]                           # == self.beta.mean(dim=0)
    inter_mean = m3[:, 1:6]                          # == self.inter_para.mean(0)

    x1 = x[:, 90:91]
    x2 = x[:, 91:92]
    g_ij = x[:, 92:97]
    T = x[:, 97:98]
    mw1 = x[:, 98:99]
    mw2 = x[:, 99:100]

    inv_T = 1.0 / T                                  # shared by t1 / t2
    inv_Tb = 1.0 / (T - beta_mean)                   # shared by t1 / t2

    t1 = x1 * (out1[:, 0:1] + out1[:, 1:2] * inv_T + out1[:, 2:3] * inv_Tb
               + out1[:, 3:4] * jnp.log(x1 * mw1))
    t2 = x2 * (out2[:, 0:1] + out2[:, 1:2] * inv_T + out2[:, 2:3] * inv_Tb
               + out2[:, 3:4] * jnp.log(x2 * mw2))
    # torch.mm(g_ij, inter_para.mean(0).reshape(5, 1)).reshape(-1)
    mix = jnp.sum(g_ij * inter_mean, axis=1, keepdims=True)          # (Np, 1)

    out_ref[...] = t1 + t2 + x1 * x2 * mix


# ------------- host-side parameter packing / BN-affine folding -------------

def _fold_net(params):
    """Fold each affine BN's (gamma, beta) into the following linear layer."""
    w0, b0, g0, be0, wh, bh, gh, beh, wo, bo = params
    gammas = [g0[0], gh[0], gh[1]]
    betas = [be0[0], beh[0], beh[1]]
    lin_w = [wh[0], wh[1], wo]
    lin_b = [bh[0], bh[1], bo[0]]
    fw, fb = [], []
    for g, be, w, b in zip(gammas, betas, lin_w, lin_b):
        fw.append(w * g[:, None])        # diag(gamma) @ W
        fb.append(be @ w + b)            # beta @ W + b
    return w0, b0[0], fw, fb


def pack_params(params1, params2, params3):
    H = HIDDEN
    (w0_1, b0_1, fw1, fb1) = _fold_net(params1)
    (w0_2, b0_2, fw2, fb2) = _fold_net(params2)
    (w0_3, b0_3, fw3, fb3) = _fold_net(params3)

    # First-layer block matrix (100, 96), zero-padded.
    W0 = jnp.zeros((100, 3 * H), jnp.float32)
    W0 = W0.at[0:45, 0:H].set(w0_1)
    W0 = W0.at[45:90, H:2 * H].set(w0_2)
    W0 = W0.at[0:100, 2 * H:3 * H].set(w0_3)

    # Block-diagonal hidden layers, stored as a flat (2*96, 96) 2-D slab.
    def blkdiag(a, b, c):
        z = jnp.zeros((3 * H, 3 * H), jnp.float32)
        z = z.at[0:H, 0:H].set(a)
        z = z.at[H:2 * H, H:2 * H].set(b)
        z = z.at[2 * H:3 * H, 2 * H:3 * H].set(c)
        return z

    WH = jnp.concatenate(
        [blkdiag(fw1[i], fw2[i], fw3[i]) for i in range(NUM_HIDDEN)], axis=0)

    # Block-diagonal output layer (96, 14).
    WO = jnp.zeros((3 * H, OUT13), jnp.float32)
    WO = WO.at[0:H, 0:4].set(fw1[2])
    WO = WO.at[H:2 * H, 4:8].set(fw2[2])
    WO = WO.at[2 * H:3 * H, 8:14].set(fw3[2])

    # Bias slab (4, 96): row 0 = first-layer bias, rows 1-2 = hidden biases,
    # row 3 = output bias (first 14 lanes valid).
    BIAS = jnp.zeros((4, 3 * H), jnp.float32)
    BIAS = BIAS.at[0, 0:H].set(b0_1)
    BIAS = BIAS.at[0, H:2 * H].set(b0_2)
    BIAS = BIAS.at[0, 2 * H:3 * H].set(b0_3)
    for i in range(NUM_HIDDEN):
        BIAS = BIAS.at[1 + i, 0:H].set(fb1[i])
        BIAS = BIAS.at[1 + i, H:2 * H].set(fb2[i])
        BIAS = BIAS.at[1 + i, 2 * H:3 * H].set(fb3[i])
    BIAS = BIAS.at[3, 0:4].set(fb1[2])
    BIAS = BIAS.at[3, 4:8].set(fb2[2])
    BIAS = BIAS.at[3, 8:14].set(fb3[2])

    return W0, WH, WO, BIAS


def viscosity_forward(X, params1, params2, params3, exact_gelu=True):
    # Implements forward(X, training=True).
    # TODO(synk): the training=False path reuses self.beta / self.inter_para cached
    # from a previous call (module state); that statefulness is not modeled here.
    X = jnp.asarray(X, jnp.float32)
    N = X.shape[0]
    N_pad = max(8, ((N + 7) // 8) * 8)               # 8-sublane alignment
    if N_pad != N:
        X = jnp.pad(X, ((0, N_pad - N), (0, 0)))     # masked inside the kernel

    W0, WH, WO, BIAS = pack_params(params1, params2, params3)
    n_valid = jnp.array([N], dtype=jnp.int32)

    kernel = functools.partial(_viscosity_kernel, exact_gelu=exact_gelu)
    out = pl.pallas_call(
        kernel,
        out_shape=jax.ShapeDtypeStruct((N_pad, 1), jnp.float32),
        in_specs=[
            pl.BlockSpec(memory_space=pltpu.MemorySpace.SMEM),   # n_valid scalar
            pl.BlockSpec(memory_space=pltpu.MemorySpace.VMEM),   # X (Np,100)
            pl.BlockSpec(memory_space=pltpu.MemorySpace.VMEM),   # W0 (100,96)
            pl.BlockSpec(memory_space=pltpu.MemorySpace.VMEM),   # WH (192,96)
            pl.BlockSpec(memory_space=pltpu.MemorySpace.VMEM),   # WO (96,14)
            pl.BlockSpec(memory_space=pltpu.MemorySpace.VMEM),   # bias slab (4,96)
        ],
        out_specs=pl.BlockSpec(memory_space=pltpu.MemorySpace.VMEM),
        compiler_params=pltpu.CompilerParams(vmem_limit_bytes=32 * 1024 * 1024),
    )(n_valid, X, W0, WH, WO, BIAS)
    return out[:N, 0]


# ---------------- deterministic parameter construction ----------------

def _linear_init(key, fan_in, fan_out):
    kw, kb = jax.random.split(key)
    bound = 1.0 / np.sqrt(fan_in)
    w = jax.random.uniform(kw, (fan_in, fan_out), jnp.float32, -bound, bound)
    b = jax.random.uniform(kb, (1, fan_out), jnp.float32, -bound, bound)
    return w, b


def init_net(key, in_dim, out_dim, hidden=HIDDEN, n_hidden=NUM_HIDDEN):
    k0, k1, k2 = jax.random.split(key, 3)
    w0, b0 = _linear_init(k0, in_dim, hidden)
    g0 = jnp.ones((1, hidden), jnp.float32)      # BN affine defaults (gamma=1, beta=0)
    be0 = jnp.zeros((1, hidden), jnp.float32)
    wh_list, bh_list = [], []
    for kk in jax.random.split(k1, n_hidden):
        w, b = _linear_init(kk, hidden, hidden)
        wh_list.append(w)
        bh_list.append(b[0])
    wh = jnp.stack(wh_list)                      # (n_hidden, hidden, hidden)
    bh = jnp.stack(bh_list)                      # (n_hidden, hidden)
    gh = jnp.ones((n_hidden, hidden), jnp.float32)
    beh = jnp.zeros((n_hidden, hidden), jnp.float32)
    wo, bo = _linear_init(k2, hidden, out_dim)
    return (w0, b0, g0, be0, wh, bh, gh, beh, wo, bo)


if __name__ == "__main__":
    key = jax.random.PRNGKey(0)
    kx, k1, k2, k3 = jax.random.split(key, 4)

    N = 8  # batch dim maps to sublanes, feature dim to lanes

    # Build a physically plausible X = [feat1(45) | feat2(45) | x1 x2 g_ij(5) T mw1 mw2]
    ka, kb, kc, kd, ke, kg = jax.random.split(kx, 6)
    feats = jax.random.normal(ka, (N, 90), jnp.float32)
    x1 = jax.random.uniform(kb, (N, 1), jnp.float32, 0.1, 0.9)
    x2 = 1.0 - x1
    g_ij = jax.random.normal(kg, (N, 5), jnp.float32)
    T = jax.random.uniform(kc, (N, 1), jnp.float32, 280.0, 360.0)
    mw1 = jax.random.uniform(kd, (N, 1), jnp.float32, 20.0, 100.0)
    mw2 = jax.random.uniform(ke, (N, 1), jnp.float32, 20.0, 100.0)
    X = jnp.concatenate([feats, x1, x2, g_ij, T, mw1, mw2], axis=1)  # (N, 100)

    params1 = init_net(k1, 45, 4)
    params2 = init_net(k2, 45, 4)
    params3 = init_net(k3, 100, 6)

    try:
        out = jax.block_until_ready(
            viscosity_forward(X, params1, params2, params3, exact_gelu=True))
    except Exception:
        # Fallback in case exact erf-based GELU does not lower on this backend.
        out = jax.block_until_ready(
            viscosity_forward(X, params1, params2, params3, exact_gelu=False))

    assert out.shape == (N,)
    assert bool(jnp.all(jnp.isfinite(out)))
    print("KERNEL_OK")
</pallas_src>

<mosaic_0001>
module attributes {stable_mosaic.version = 11 : i64} {
  func.func @_viscosity_kernel(%arg0: memref<1xi32, #tpu.memory_space<smem>>, %arg1: memref<8x100xf32, #tpu.memory_space<vmem>>, %arg2: memref<100x96xf32, #tpu.memory_space<vmem>>, %arg3: memref<192x96xf32, #tpu.memory_space<vmem>>, %arg4: memref<96x14xf32, #tpu.memory_space<vmem>>, %arg5: memref<4x96xf32, #tpu.memory_space<vmem>>, %arg6: memref<8x1xf32, #tpu.memory_space<vmem>>) attributes {dimension_semantics = [], scalar_prefetch = 0 : i64, scratch_operands = 0 : i64, tpu.core_type = #tpu.core_type<tc>} {
    %c0 = arith.constant 0 : index
    %c0_0 = arith.constant 0 : index
    %0 = vector.load %arg1[%c0, %c0_0] : memref<8x100xf32, #tpu.memory_space<vmem>>, vector<8x100xf32>
    %c0_1 = arith.constant 0 : index
    %1 = memref.load %arg0[%c0_1] : memref<1xi32, #tpu.memory_space<smem>>
    %2 = arith.sitofp %1 : i32 to f32
    %cst = arith.constant 1.000000e+00 : f32
    %3 = arith.divf %cst, %2 : f32
    %4 = tpu.iota {dimensions = array<i32: 0>} : vector<8x1xi32>
    %5 = vector.broadcast %1 : i32 to vector<8x1xi32>
    %6 = arith.cmpi slt, %4, %5 : vector<8x1xi32>
    %7 = arith.extui %6 : vector<8x1xi1> to vector<8x1xi32>
    %8 = arith.sitofp %7 : vector<8x1xi32> to vector<8x1xf32>
    %9 = vector.broadcast %8 : vector<8x1xf32> to vector<8x100xf32>
    %10 = arith.mulf %0, %9 : vector<8x100xf32>
    %cst_2 = arith.constant dense<0.000000e+00> : vector<100xf32>
    %11 = vector.multi_reduction <add>, %10, %cst_2 [0] : vector<8x100xf32> to vector<100xf32>
    %12 = vector.shape_cast %11 : vector<100xf32> to vector<1x100xf32>
    %13 = vector.broadcast %3 : f32 to vector<1x100xf32>
    %14 = arith.mulf %12, %13 : vector<1x100xf32>
    %15 = arith.mulf %10, %0 : vector<8x100xf32>
    %cst_3 = arith.constant dense<0.000000e+00> : vector<100xf32>
    %16 = vector.multi_reduction <add>, %15, %cst_3 [0] : vector<8x100xf32> to vector<100xf32>
    %17 = vector.shape_cast %16 : vector<100xf32> to vector<1x100xf32>
    %18 = vector.broadcast %3 : f32 to vector<1x100xf32>
    %19 = arith.mulf %17, %18 : vector<1x100xf32>
    %20 = arith.mulf %14, %14 : vector<1x100xf32>
    %21 = arith.subf %19, %20 : vector<1x100xf32>
    %22 = vector.broadcast %14 : vector<1x100xf32> to vector<8x100xf32>
    %23 = arith.subf %0, %22 : vector<8x100xf32>
    %cst_4 = arith.constant 9.99999974E-6 : f32
    %24 = vector.broadcast %cst_4 : f32 to vector<1x100xf32>
    %25 = arith.addf %21, %24 : vector<1x100xf32>
    %26 = math.rsqrt %25 : vector<1x100xf32>
    %27 = vector.broadcast %26 : vector<1x100xf32> to vector<8x100xf32>
    %28 = arith.mulf %23, %27 : vector<8x100xf32>
    %c0_5 = arith.constant 0 : index
    %c0_6 = arith.constant 0 : index
    %29 = vector.load %arg2[%c0_5, %c0_6] : memref<100x96xf32, #tpu.memory_space<vmem>>, vector<100x96xf32>
    %cst_7 = arith.constant dense<0.000000e+00> : vector<8x96xf32>
    %30 = tpu.matmul %28, %29, %cst_7 {dimension_numbers = #tpu.dot_dimension_numbers<[1], [0], [0], [1], [0, 0, 1, 1], [], []>} : vector<8x100xf32>, vector<100x96xf32>, vector<8x96xf32> -> vector<8x96xf32>
    %c0_8 = arith.constant 0 : index
    %c0_9 = arith.constant 0 : index
    %31 = vector.load %arg5[%c0_8, %c0_9] : memref<4x96xf32, #tpu.memory_space<vmem>>, vector<1x96xf32>
    %32 = vector.broadcast %31 : vector<1x96xf32> to vector<8x96xf32>
    %33 = arith.addf %30, %32 : vector<8x96xf32>
    %cst_10 = arith.constant 5.000000e-01 : f32
    %34 = vector.broadcast %cst_10 : f32 to vector<8x96xf32>
    %35 = arith.mulf %34, %33 : vector<8x96xf32>
    %cst_11 = arith.constant 0.707106769 : f32
    %36 = vector.broadcast %cst_11 : f32 to vector<8x96xf32>
    %37 = arith.mulf %33, %36 : vector<8x96xf32>
    %38 = math.erf %37 : vector<8x96xf32>
    %cst_12 = arith.constant 1.000000e+00 : f32
    %39 = vector.broadcast %cst_12 : f32 to vector<8x96xf32>
    %40 = arith.addf %39, %38 : vector<8x96xf32>
    %41 = arith.mulf %35, %40 : vector<8x96xf32>
    %42 = vector.broadcast %8 : vector<8x1xf32> to vector<8x96xf32>
    %43 = arith.mulf %41, %42 : vector<8x96xf32>
    %cst_13 = arith.constant dense<0.000000e+00> : vector<96xf32>
    %44 = vector.multi_reduction <add>, %43, %cst_13 [0] : vector<8x96xf32> to vector<96xf32>
    %45 = vector.shape_cast %44 : vector<96xf32> to vector<1x96xf32>
    %46 = vector.broadcast %3 : f32 to vector<1x96xf32>
    %47 = arith.mulf %45, %46 : vector<1x96xf32>
    %48 = arith.mulf %43, %41 : vector<8x96xf32>
    %cst_14 = arith.constant dense<0.000000e+00> : vector<96xf32>
    %49 = vector.multi_reduction <add>, %48, %cst_14 [0] : vector<8x96xf32> to vector<96xf32>
    %50 = vector.shape_cast %49 : vector<96xf32> to vector<1x96xf32>
    %51 = vector.broadcast %3 : f32 to vector<1x96xf32>
    %52 = arith.mulf %50, %51 : vector<1x96xf32>
    %53 = arith.mulf %47, %47 : vector<1x96xf32>
    %54 = arith.subf %52, %53 : vector<1x96xf32>
    %55 = vector.broadcast %47 : vector<1x96xf32> to vector<8x96xf32>
    %56 = arith.subf %41, %55 : vector<8x96xf32>
    %cst_15 = arith.constant 9.99999974E-6 : f32
    %57 = vector.broadcast %cst_15 : f32 to vector<1x96xf32>
    %58 = arith.addf %54, %57 : vector<1x96xf32>
    %59 = math.rsqrt %58 : vector<1x96xf32>
    %60 = vector.broadcast %59 : vector<1x96xf32> to vector<8x96xf32>
    %61 = arith.mulf %56, %60 : vector<8x96xf32>
    %c0_16 = arith.constant 0 : index
    %c0_17 = arith.constant 0 : index
    %62 = vector.load %arg3[%c0_16, %c0_17] : memref<192x96xf32, #tpu.memory_space<vmem>>, vector<96x96xf32>
    %cst_18 = arith.constant dense<0.000000e+00> : vector<8x96xf32>
    %63 = tpu.matmul %61, %62, %cst_18 {dimension_numbers = #tpu.dot_dimension_numbers<[1], [0], [0], [1], [0, 0, 1, 1], [], []>} : vector<8x96xf32>, vector<96x96xf32>, vector<8x96xf32> -> vector<8x96xf32>
    %c1 = arith.constant 1 : index
    %c0_19 = arith.constant 0 : index
    %64 = vector.load %arg5[%c1, %c0_19] : memref<4x96xf32, #tpu.memory_space<vmem>>, vector<1x96xf32>
    %65 = vector.broadcast %64 : vector<1x96xf32> to vector<8x96xf32>
    %66 = arith.addf %63, %65 : vector<8x96xf32>
    %cst_20 = arith.constant 5.000000e-01 : f32
    %67 = vector.broadcast %cst_20 : f32 to vector<8x96xf32>
    %68 = arith.mulf %67, %66 : vector<8x96xf32>
    %cst_21 = arith.constant 0.707106769 : f32
    %69 = vector.broadcast %cst_21 : f32 to vector<8x96xf32>
    %70 = arith.mulf %66, %69 : vector<8x96xf32>
    %71 = math.erf %70 : vector<8x96xf32>
    %cst_22 = arith.constant 1.000000e+00 : f32
    %72 = vector.broadcast %cst_22 : f32 to vector<8x96xf32>
    %73 = arith.addf %72, %71 : vector<8x96xf32>
    %74 = arith.mulf %68, %73 : vector<8x96xf32>
    %75 = vector.broadcast %8 : vector<8x1xf32> to vector<8x96xf32>
    %76 = arith.mulf %74, %75 : vector<8x96xf32>
    %cst_23 = arith.constant dense<0.000000e+00> : vector<96xf32>
    %77 = vector.multi_reduction <add>, %76, %cst_23 [0] : vector<8x96xf32> to vector<96xf32>
    %78 = vector.shape_cast %77 : vector<96xf32> to vector<1x96xf32>
    %79 = vector.broadcast %3 : f32 to vector<1x96xf32>
    %80 = arith.mulf %78, %79 : vector<1x96xf32>
    %81 = arith.mulf %76, %74 : vector<8x96xf32>
    %cst_24 = arith.constant dense<0.000000e+00> : vector<96xf32>
    %82 = vector.multi_reduction <add>, %81, %cst_24 [0] : vector<8x96xf32> to vector<96xf32>
    %83 = vector.shape_cast %82 : vector<96xf32> to vector<1x96xf32>
    %84 = vector.broadcast %3 : f32 to vector<1x96xf32>
    %85 = arith.mulf %83, %84 : vector<1x96xf32>
    %86 = arith.mulf %80, %80 : vector<1x96xf32>
    %87 = arith.subf %85, %86 : vector<1x96xf32>
    %88 = vector.broadcast %80 : vector<1x96xf32> to vector<8x96xf32>
    %89 = arith.subf %74, %88 : vector<8x96xf32>
    %cst_25 = arith.constant 9.99999974E-6 : f32
    %90 = vector.broadcast %cst_25 : f32 to vector<1x96xf32>
    %91 = arith.addf %87, %90 : vector<1x96xf32>
    %92 = math.rsqrt %91 : vector<1x96xf32>
    %93 = vector.broadcast %92 : vector<1x96xf32> to vector<8x96xf32>
    %94 = arith.mulf %89, %93 : vector<8x96xf32>
    %c96 = arith.constant 96 : index
    %c0_26 = arith.constant 0 : index
    %95 = vector.load %arg3[%c96, %c0_26] : memref<192x96xf32, #tpu.memory_space<vmem>>, vector<96x96xf32>
    %cst_27 = arith.constant dense<0.000000e+00> : vector<8x96xf32>
    %96 = tpu.matmul %94, %95, %cst_27 {dimension_numbers = #tpu.dot_dimension_numbers<[1], [0], [0], [1], [0, 0, 1, 1], [], []>} : vector<8x96xf32>, vector<96x96xf32>, vector<8x96xf32> -> vector<8x96xf32>
    %c2 = arith.constant 2 : index
    %c0_28 = arith.constant 0 : index
    %97 = vector.load %arg5[%c2, %c0_28] : memref<4x96xf32, #tpu.memory_space<vmem>>, vector<1x96xf32>
    %98 = vector.broadcast %97 : vector<1x96xf32> to vector<8x96xf32>
    %99 = arith.addf %96, %98 : vector<8x96xf32>
    %cst_29 = arith.constant 5.000000e-01 : f32
    %100 = vector.broadcast %cst_29 : f32 to vector<8x96xf32>
    %101 = arith.mulf %100, %99 : vector<8x96xf32>
    %cst_30 = arith.constant 0.707106769 : f32
    %102 = vector.broadcast %cst_30 : f32 to vector<8x96xf32>
    %103 = arith.mulf %99, %102 : vector<8x96xf32>
    %104 = math.erf %103 : vector<8x96xf32>
    %cst_31 = arith.constant 1.000000e+00 : f32
    %105 = vector.broadcast %cst_31 : f32 to vector<8x96xf32>
    %106 = arith.addf %105, %104 : vector<8x96xf32>
    %107 = arith.mulf %101, %106 : vector<8x96xf32>
    %108 = vector.broadcast %8 : vector<8x1xf32> to vector<8x96xf32>
    %109 = arith.mulf %107, %108 : vector<8x96xf32>
    %cst_32 = arith.constant dense<0.000000e+00> : vector<96xf32>
    %110 = vector.multi_reduction <add>, %109, %cst_32 [0] : vector<8x96xf32> to vector<96xf32>
    %111 = vector.shape_cast %110 : vector<96xf32> to vector<1x96xf32>
    %112 = vector.broadcast %3 : f32 to vector<1x96xf32>
    %113 = arith.mulf %111, %112 : vector<1x96xf32>
    %114 = arith.mulf %109, %107 : vector<8x96xf32>
    %cst_33 = arith.constant dense<0.000000e+00> : vector<96xf32>
    %115 = vector.multi_reduction <add>, %114, %cst_33 [0] : vector<8x96xf32> to vector<96xf32>
    %116 = vector.shape_cast %115 : vector<96xf32> to vector<1x96xf32>
    %117 = vector.broadcast %3 : f32 to vector<1x96xf32>
    %118 = arith.mulf %116, %117 : vector<1x96xf32>
    %119 = arith.mulf %113, %113 : vector<1x96xf32>
    %120 = arith.subf %118, %119 : vector<1x96xf32>
    %121 = vector.broadcast %113 : vector<1x96xf32> to vector<8x96xf32>
    %122 = arith.subf %107, %121 : vector<8x96xf32>
    %cst_34 = arith.constant 9.99999974E-6 : f32
    %123 = vector.broadcast %cst_34 : f32 to vector<1x96xf32>
    %124 = arith.addf %120, %123 : vector<1x96xf32>
    %125 = math.rsqrt %124 : vector<1x96xf32>
    %126 = vector.broadcast %125 : vector<1x96xf32> to vector<8x96xf32>
    %127 = arith.mulf %122, %126 : vector<8x96xf32>
    %c0_35 = arith.constant 0 : index
    %c0_36 = arith.constant 0 : index
    %128 = vector.load %arg4[%c0_35, %c0_36] : memref<96x14xf32, #tpu.memory_space<vmem>>, vector<96x14xf32>
    %cst_37 = arith.constant dense<0.000000e+00> : vector<8x14xf32>
    %129 = tpu.matmul %127, %128, %cst_37 {dimension_numbers = #tpu.dot_dimension_numbers<[1], [0], [0], [1], [0, 0, 1, 1], [], []>} : vector<8x96xf32>, vector<96x14xf32>, vector<8x14xf32> -> vector<8x14xf32>
    %c3 = arith.constant 3 : index
    %c0_38 = arith.constant 0 : index
    %130 = vector.load %arg5[%c3, %c0_38] : memref<4x96xf32, #tpu.memory_space<vmem>>, vector<1x14xf32>
    %131 = vector.broadcast %130 : vector<1x14xf32> to vector<8x14xf32>
    %132 = arith.addf %129, %131 : vector<8x14xf32>
    %133 = vector.extract_strided_slice %132 {offsets = [0, 0], sizes = [8, 4], strides = [1, 1]} : vector<8x14xf32> to vector<8x4xf32>
    %134 = vector.extract_strided_slice %132 {offsets = [0, 4], sizes = [8, 4], strides = [1, 1]} : vector<8x14xf32> to vector<8x4xf32>
    %135 = vector.extract_strided_slice %132 {offsets = [0, 8], sizes = [8, 6], strides = [1, 1]} : vector<8x14xf32> to vector<8x6xf32>
    %136 = vector.broadcast %8 : vector<8x1xf32> to vector<8x6xf32>
    %137 = arith.mulf %135, %136 : vector<8x6xf32>
    %cst_39 = arith.constant dense<0.000000e+00> : vector<6xf32>
    %138 = vector.multi_reduction <add>, %137, %cst_39 [0] : vector<8x6xf32> to vector<6xf32>
    %139 = vector.shape_cast %138 : vector<6xf32> to vector<1x6xf32>
    %140 = vector.broadcast %3 : f32 to vector<1x6xf32>
    %141 = arith.mulf %139, %140 : vector<1x6xf32>
    %142 = vector.extract_strided_slice %141 {offsets = [0, 0], sizes = [1, 1], strides = [1, 1]} : vector<1x6xf32> to vector<1x1xf32>
    %143 = vector.extract_strided_slice %141 {offsets = [0, 1], sizes = [1, 5], strides = [1, 1]} : vector<1x6xf32> to vector<1x5xf32>
    %144 = vector.extract_strided_slice %0 {offsets = [0, 90], sizes = [8, 1], strides = [1, 1]} : vector<8x100xf32> to vector<8x1xf32>
    %145 = vector.extract_strided_slice %0 {offsets = [0, 91], sizes = [8, 1], strides = [1, 1]} : vector<8x100xf32> to vector<8x1xf32>
    %146 = vector.extract_strided_slice %0 {offsets = [0, 92], sizes = [8, 5], strides = [1, 1]} : vector<8x100xf32> to vector<8x5xf32>
    %147 = vector.extract_strided_slice %0 {offsets = [0, 97], sizes = [8, 1], strides = [1, 1]} : vector<8x100xf32> to vector<8x1xf32>
    %148 = vector.extract_strided_slice %0 {offsets = [0, 98], sizes = [8, 1], strides = [1, 1]} : vector<8x100xf32> to vector<8x1xf32>
    %149 = vector.extract_strided_slice %0 {offsets = [0, 99], sizes = [8, 1], strides = [1, 1]} : vector<8x100xf32> to vector<8x1xf32>
    %cst_40 = arith.constant 1.000000e+00 : f32
    %150 = vector.broadcast %cst_40 : f32 to vector<8x1xf32>
    %151 = arith.divf %150, %147 : vector<8x1xf32>
    %152 = vector.broadcast %142 : vector<1x1xf32> to vector<8x1xf32>
    %153 = arith.subf %147, %152 : vector<8x1xf32>
    %cst_41 = arith.constant 1.000000e+00 : f32
    %154 = vector.broadcast %cst_41 : f32 to vector<8x1xf32>
    %155 = arith.divf %154, %153 : vector<8x1xf32>
    %156 = vector.extract_strided_slice %133 {offsets = [0, 0], sizes = [8, 1], strides = [1, 1]} : vector<8x4xf32> to vector<8x1xf32>
    %157 = vector.extract_strided_slice %133 {offsets = [0, 1], sizes = [8, 1], strides = [1, 1]} : vector<8x4xf32> to vector<8x1xf32>
    %158 = arith.mulf %157, %151 : vector<8x1xf32>
    %159 = arith.addf %156, %158 : vector<8x1xf32>
    %160 = vector.extract_strided_slice %133 {offsets = [0, 2], sizes = [8, 1], strides = [1, 1]} : vector<8x4xf32> to vector<8x1xf32>
    %161 = arith.mulf %160, %155 : vector<8x1xf32>
    %162 = arith.addf %159, %161 : vector<8x1xf32>
    %163 = vector.extract_strided_slice %133 {offsets = [0, 3], sizes = [8, 1], strides = [1, 1]} : vector<8x4xf32> to vector<8x1xf32>
    %164 = arith.mulf %144, %148 : vector<8x1xf32>
    %165 = math.log %164 : vector<8x1xf32>
    %166 = arith.mulf %163, %165 : vector<8x1xf32>
    %167 = arith.addf %162, %166 : vector<8x1xf32>
    %168 = arith.mulf %144, %167 : vector<8x1xf32>
    %169 = vector.extract_strided_slice %134 {offsets = [0, 0], sizes = [8, 1], strides = [1, 1]} : vector<8x4xf32> to vector<8x1xf32>
    %170 = vector.extract_strided_slice %134 {offsets = [0, 1], sizes = [8, 1], strides = [1, 1]} : vector<8x4xf32> to vector<8x1xf32>
    %171 = arith.mulf %170, %151 : vector<8x1xf32>
    %172 = arith.addf %169, %171 : vector<8x1xf32>
    %173 = vector.extract_strided_slice %134 {offsets = [0, 2], sizes = [8, 1], strides = [1, 1]} : vector<8x4xf32> to vector<8x1xf32>
    %174 = arith.mulf %173, %155 : vector<8x1xf32>
    %175 = arith.addf %172, %174 : vector<8x1xf32>
    %176 = vector.extract_strided_slice %134 {offsets = [0, 3], sizes = [8, 1], strides = [1, 1]} : vector<8x4xf32> to vector<8x1xf32>
    %177 = arith.mulf %145, %149 : vector<8x1xf32>
    %178 = math.log %177 : vector<8x1xf32>
    %179 = arith.mulf %176, %178 : vector<8x1xf32>
    %180 = arith.addf %175, %179 : vector<8x1xf32>
    %181 = arith.mulf %145, %180 : vector<8x1xf32>
    %182 = vector.broadcast %143 : vector<1x5xf32> to vector<8x5xf32>
    %183 = arith.mulf %146, %182 : vector<8x5xf32>
    %cst_42 = arith.constant dense<0.000000e+00> : vector<8xf32>
    %184 = vector.multi_reduction <add>, %183, %cst_42 [1] : vector<8x5xf32> to vector<8xf32>
    %185 = vector.shape_cast %184 : vector<8xf32> to vector<8x1xf32>
    %186 = arith.addf %168, %181 : vector<8x1xf32>
    %187 = arith.mulf %144, %145 : vector<8x1xf32>
    %188 = arith.mulf %187, %185 : vector<8x1xf32>
    %189 = arith.addf %186, %188 : vector<8x1xf32>
    %c0_43 = arith.constant 0 : index
    %c0_44 = arith.constant 0 : index
    %190 = vector.load %arg6[%c0_43, %c0_44] : memref<8x1xf32, #tpu.memory_space<vmem>>, vector<8x1xf32>
    tpu.vector_store %arg6[%c0_43, %c0_44], %189 {strides = array<i32>} : memref<8x1xf32, #tpu.memory_space<vmem>>, vector<8x1xf32>,
    return
  }
}

module attributes {stable_mosaic.version = 11 : i64} {
  func.func @_viscosity_kernel(%arg0: memref<1xi32, #tpu.memory_space<smem>>, %arg1: memref<8x100xf32, #tpu.memory_space<vmem>>, %arg2: memref<100x96xf32, #tpu.memory_space<vmem>>, %arg3: memref<192x96xf32, #tpu.memory_space<vmem>>, %arg4: memref<96x14xf32, #tpu.memory_space<vmem>>, %arg5: memref<4x96xf32, #tpu.memory_space<vmem>>, %arg6: memref<8x1xf32, #tpu.memory_space<vmem>>) attributes {dimension_semantics = [], scalar_prefetch = 0 : i64, scratch_operands = 0 : i64, tpu.core_type = #tpu.core_type<tc>} {
    %c0 = arith.constant 0 : index
    %c0_0 = arith.constant 0 : index
    %0 = vector.load %arg1[%c0, %c0_0] : memref<8x100xf32, #tpu.memory_space<vmem>>, vector<8x100xf32>
    %c0_1 = arith.constant 0 : index
    %1 = memref.load %arg0[%c0_1] : memref<1xi32, #tpu.memory_space<smem>>
    %2 = arith.sitofp %1 : i32 to f32
    %cst = arith.constant 1.000000e+00 : f32
    %3 = arith.divf %cst, %2 : f32
    %4 = tpu.iota {dimensions = array<i32: 0>} : vector<8x1xi32>
    %5 = vector.broadcast %1 : i32 to vector<8x1xi32>
    %6 = arith.cmpi slt, %4, %5 : vector<8x1xi32>
    %7 = arith.extui %6 : vector<8x1xi1> to vector<8x1xi32>
    %8 = arith.sitofp %7 : vector<8x1xi32> to vector<8x1xf32>
    %9 = vector.broadcast %8 : vector<8x1xf32> to vector<8x100xf32>
    %10 = arith.mulf %0, %9 : vector<8x100xf32>
    %cst_2 = arith.constant dense<0.000000e+00> : vector<100xf32>
    %11 = vector.multi_reduction <add>, %10, %cst_2 [0] : vector<8x100xf32> to vector<100xf32>
    %12 = vector.shape_cast %11 : vector<100xf32> to vector<1x100xf32>
    %13 = vector.broadcast %3 : f32 to vector<1x100xf32>
    %14 = arith.mulf %12, %13 : vector<1x100xf32>
    %15 = arith.mulf %10, %0 : vector<8x100xf32>
    %cst_3 = arith.constant dense<0.000000e+00> : vector<100xf32>
    %16 = vector.multi_reduction <add>, %15, %cst_3 [0] : vector<8x100xf32> to vector<100xf32>
    %17 = vector.shape_cast %16 : vector<100xf32> to vector<1x100xf32>
    %18 = vector.broadcast %3 : f32 to vector<1x100xf32>
    %19 = arith.mulf %17, %18 : vector<1x100xf32>
    %20 = arith.mulf %14, %14 : vector<1x100xf32>
    %21 = arith.subf %19, %20 : vector<1x100xf32>
    %22 = vector.broadcast %14 : vector<1x100xf32> to vector<8x100xf32>
    %23 = arith.subf %0, %22 : vector<8x100xf32>
    %cst_4 = arith.constant 9.99999974E-6 : f32
    %24 = vector.broadcast %cst_4 : f32 to vector<1x100xf32>
    %25 = arith.addf %21, %24 : vector<1x100xf32>
    %26 = math.rsqrt %25 : vector<1x100xf32>
    %27 = vector.broadcast %26 : vector<1x100xf32> to vector<8x100xf32>
    %28 = arith.mulf %23, %27 : vector<8x100xf32>
    %c0_5 = arith.constant 0 : index
    %c0_6 = arith.constant 0 : index
    %29 = vector.load %arg2[%c0_5, %c0_6] : memref<100x96xf32, #tpu.memory_space<vmem>>, vector<100x96xf32>
    %cst_7 = arith.constant dense<0.000000e+00> : vector<8x96xf32>
    %30 = tpu.matmul %28, %29, %cst_7 {dimension_numbers = #tpu.dot_dimension_numbers<[1], [0], [0], [1], [0, 0, 1, 1], [], []>} : vector<8x100xf32>, vector<100x96xf32>, vector<8x96xf32> -> vector<8x96xf32>
    %c0_8 = arith.constant 0 : index
    %c0_9 = arith.constant 0 : index
    %31 = vector.load %arg5[%c0_8, %c0_9] : memref<4x96xf32, #tpu.memory_space<vmem>>, vector<1x96xf32>
    %32 = vector.broadcast %31 : vector<1x96xf32> to vector<8x96xf32>
    %33 = arith.addf %30, %32 : vector<8x96xf32>
    %cst_10 = arith.constant 5.000000e-01 : f32
    %34 = vector.broadcast %cst_10 : f32 to vector<8x96xf32>
    %35 = arith.mulf %34, %33 : vector<8x96xf32>
    %cst_11 = arith.constant 4.471500e-02 : f32
    %36 = vector.broadcast %cst_11 : f32 to vector<8x96xf32>
    %37 = arith.mulf %36, %33 : vector<8x96xf32>
    %38 = arith.mulf %37, %33 : vector<8x96xf32>
    %39 = arith.mulf %38, %33 : vector<8x96xf32>
    %40 = arith.addf %33, %39 : vector<8x96xf32>
    %cst_12 = arith.constant 0.797884583 : f32
    %41 = vector.broadcast %cst_12 : f32 to vector<8x96xf32>
    %42 = arith.mulf %41, %40 : vector<8x96xf32>
    %43 = math.tanh %42 : vector<8x96xf32>
    %cst_13 = arith.constant 1.000000e+00 : f32
    %44 = vector.broadcast %cst_13 : f32 to vector<8x96xf32>
    %45 = arith.addf %44, %43 : vector<8x96xf32>
    %46 = arith.mulf %35, %45 : vector<8x96xf32>
    %47 = vector.broadcast %8 : vector<8x1xf32> to vector<8x96xf32>
    %48 = arith.mulf %46, %47 : vector<8x96xf32>
    %cst_14 = arith.constant dense<0.000000e+00> : vector<96xf32>
    %49 = vector.multi_reduction <add>, %48, %cst_14 [0] : vector<8x96xf32> to vector<96xf32>
    %50 = vector.shape_cast %49 : vector<96xf32> to vector<1x96xf32>
    %51 = vector.broadcast %3 : f32 to vector<1x96xf32>
    %52 = arith.mulf %50, %51 : vector<1x96xf32>
    %53 = arith.mulf %48, %46 : vector<8x96xf32>
    %cst_15 = arith.constant dense<0.000000e+00> : vector<96xf32>
    %54 = vector.multi_reduction <add>, %53, %cst_15 [0] : vector<8x96xf32> to vector<96xf32>
    %55 = vector.shape_cast %54 : vector<96xf32> to vector<1x96xf32>
    %56 = vector.broadcast %3 : f32 to vector<1x96xf32>
    %57 = arith.mulf %55, %56 : vector<1x96xf32>
    %58 = arith.mulf %52, %52 : vector<1x96xf32>
    %59 = arith.subf %57, %58 : vector<1x96xf32>
    %60 = vector.broadcast %52 : vector<1x96xf32> to vector<8x96xf32>
    %61 = arith.subf %46, %60 : vector<8x96xf32>
    %cst_16 = arith.constant 9.99999974E-6 : f32
    %62 = vector.broadcast %cst_16 : f32 to vector<1x96xf32>
    %63 = arith.addf %59, %62 : vector<1x96xf32>
    %64 = math.rsqrt %63 : vector<1x96xf32>
    %65 = vector.broadcast %64 : vector<1x96xf32> to vector<8x96xf32>
    %66 = arith.mulf %61, %65 : vector<8x96xf32>
    %c0_17 = arith.constant 0 : index
    %c0_18 = arith.constant 0 : index
    %67 = vector.load %arg3[%c0_17, %c0_18] : memref<192x96xf32, #tpu.memory_space<vmem>>, vector<96x96xf32>
    %cst_19 = arith.constant dense<0.000000e+00> : vector<8x96xf32>
    %68 = tpu.matmul %66, %67, %cst_19 {dimension_numbers = #tpu.dot_dimension_numbers<[1], [0], [0], [1], [0, 0, 1, 1], [], []>} : vector<8x96xf32>, vector<96x96xf32>, vector<8x96xf32> -> vector<8x96xf32>
    %c1 = arith.constant 1 : index
    %c0_20 = arith.constant 0 : index
    %69 = vector.load %arg5[%c1, %c0_20] : memref<4x96xf32, #tpu.memory_space<vmem>>, vector<1x96xf32>
    %70 = vector.broadcast %69 : vector<1x96xf32> to vector<8x96xf32>
    %71 = arith.addf %68, %70 : vector<8x96xf32>
    %cst_21 = arith.constant 5.000000e-01 : f32
    %72 = vector.broadcast %cst_21 : f32 to vector<8x96xf32>
    %73 = arith.mulf %72, %71 : vector<8x96xf32>
    %cst_22 = arith.constant 4.471500e-02 : f32
    %74 = vector.broadcast %cst_22 : f32 to vector<8x96xf32>
    %75 = arith.mulf %74, %71 : vector<8x96xf32>
    %76 = arith.mulf %75, %71 : vector<8x96xf32>
    %77 = arith.mulf %76, %71 : vector<8x96xf32>
    %78 = arith.addf %71, %77 : vector<8x96xf32>
    %cst_23 = arith.constant 0.797884583 : f32
    %79 = vector.broadcast %cst_23 : f32 to vector<8x96xf32>
    %80 = arith.mulf %79, %78 : vector<8x96xf32>
    %81 = math.tanh %80 : vector<8x96xf32>
    %cst_24 = arith.constant 1.000000e+00 : f32
    %82 = vector.broadcast %cst_24 : f32 to vector<8x96xf32>
    %83 = arith.addf %82, %81 : vector<8x96xf32>
    %84 = arith.mulf %73, %83 : vector<8x96xf32>
    %85 = vector.broadcast %8 : vector<8x1xf32> to vector<8x96xf32>
    %86 = arith.mulf %84, %85 : vector<8x96xf32>
    %cst_25 = arith.constant dense<0.000000e+00> : vector<96xf32>
    %87 = vector.multi_reduction <add>, %86, %cst_25 [0] : vector<8x96xf32> to vector<96xf32>
    %88 = vector.shape_cast %87 : vector<96xf32> to vector<1x96xf32>
    %89 = vector.broadcast %3 : f32 to vector<1x96xf32>
    %90 = arith.mulf %88, %89 : vector<1x96xf32>
    %91 = arith.mulf %86, %84 : vector<8x96xf32>
    %cst_26 = arith.constant dense<0.000000e+00> : vector<96xf32>
    %92 = vector.multi_reduction <add>, %91, %cst_26 [0] : vector<8x96xf32> to vector<96xf32>
    %93 = vector.shape_cast %92 : vector<96xf32> to vector<1x96xf32>
    %94 = vector.broadcast %3 : f32 to vector<1x96xf32>
    %95 = arith.mulf %93, %94 : vector<1x96xf32>
    %96 = arith.mulf %90, %90 : vector<1x96xf32>
    %97 = arith.subf %95, %96 : vector<1x96xf32>
    %98 = vector.broadcast %90 : vector<1x96xf32> to vector<8x96xf32>
    %99 = arith.subf %84, %98 : vector<8x96xf32>
    %cst_27 = arith.constant 9.99999974E-6 : f32
    %100 = vector.broadcast %cst_27 : f32 to vector<1x96xf32>
    %101 = arith.addf %97, %100 : vector<1x96xf32>
    %102 = math.rsqrt %101 : vector<1x96xf32>
    %103 = vector.broadcast %102 : vector<1x96xf32> to vector<8x96xf32>
    %104 = arith.mulf %99, %103 : vector<8x96xf32>
    %c96 = arith.constant 96 : index
    %c0_28 = arith.constant 0 : index
    %105 = vector.load %arg3[%c96, %c0_28] : memref<192x96xf32, #tpu.memory_space<vmem>>, vector<96x96xf32>
    %cst_29 = arith.constant dense<0.000000e+00> : vector<8x96xf32>
    %106 = tpu.matmul %104, %105, %cst_29 {dimension_numbers = #tpu.dot_dimension_numbers<[1], [0], [0], [1], [0, 0, 1, 1], [], []>} : vector<8x96xf32>, vector<96x96xf32>, vector<8x96xf32> -> vector<8x96xf32>
    %c2 = arith.constant 2 : index
    %c0_30 = arith.constant 0 : index
    %107 = vector.load %arg5[%c2, %c0_30] : memref<4x96xf32, #tpu.memory_space<vmem>>, vector<1x96xf32>
    %108 = vector.broadcast %107 : vector<1x96xf32> to vector<8x96xf32>
    %109 = arith.addf %106, %108 : vector<8x96xf32>
    %cst_31 = arith.constant 5.000000e-01 : f32
    %110 = vector.broadcast %cst_31 : f32 to vector<8x96xf32>
    %111 = arith.mulf %110, %109 : vector<8x96xf32>
    %cst_32 = arith.constant 4.471500e-02 : f32
    %112 = vector.broadcast %cst_32 : f32 to vector<8x96xf32>
    %113 = arith.mulf %112, %109 : vector<8x96xf32>
    %114 = arith.mulf %113, %109 : vector<8x96xf32>
    %115 = arith.mulf %114, %109 : vector<8x96xf32>
    %116 = arith.addf %109, %115 : vector<8x96xf32>
    %cst_33 = arith.constant 0.797884583 : f32
    %117 = vector.broadcast %cst_33 : f32 to vector<8x96xf32>
    %118 = arith.mulf %117, %116 : vector<8x96xf32>
    %119 = math.tanh %118 : vector<8x96xf32>
    %cst_34 = arith.constant 1.000000e+00 : f32
    %120 = vector.broadcast %cst_34 : f32 to vector<8x96xf32>
    %121 = arith.addf %120, %119 : vector<8x96xf32>
    %122 = arith.mulf %111, %121 : vector<8x96xf32>
    %123 = vector.broadcast %8 : vector<8x1xf32> to vector<8x96xf32>
    %124 = arith.mulf %122, %123 : vector<8x96xf32>
    %cst_35 = arith.constant dense<0.000000e+00> : vector<96xf32>
    %125 = vector.multi_reduction <add>, %124, %cst_35 [0] : vector<8x96xf32> to vector<96xf32>
    %126 = vector.shape_cast %125 : vector<96xf32> to vector<1x96xf32>
    %127 = vector.broadcast %3 : f32 to vector<1x96xf32>
    %128 = arith.mulf %126, %127 : vector<1x96xf32>
    %129 = arith.mulf %124, %122 : vector<8x96xf32>
    %cst_36 = arith.constant dense<0.000000e+00> : vector<96xf32>
    %130 = vector.multi_reduction <add>, %129, %cst_36 [0] : vector<8x96xf32> to vector<96xf32>
    %131 = vector.shape_cast %130 : vector<96xf32> to vector<1x96xf32>
    %132 = vector.broadcast %3 : f32 to vector<1x96xf32>
    %133 = arith.mulf %131, %132 : vector<1x96xf32>
    %134 = arith.mulf %128, %128 : vector<1x96xf32>
    %135 = arith.subf %133, %134 : vector<1x96xf32>
    %136 = vector.broadcast %128 : vector<1x96xf32> to vector<8x96xf32>
    %137 = arith.subf %122, %136 : vector<8x96xf32>
    %cst_37 = arith.constant 9.99999974E-6 : f32
    %138 = vector.broadcast %cst_37 : f32 to vector<1x96xf32>
    %139 = arith.addf %135, %138 : vector<1x96xf32>
    %140 = math.rsqrt %139 : vector<1x96xf32>
    %141 = vector.broadcast %140 : vector<1x96xf32> to vector<8x96xf32>
    %142 = arith.mulf %137, %141 : vector<8x96xf32>
    %c0_38 = arith.constant 0 : index
    %c0_39 = arith.constant 0 : index
    %143 = vector.load %arg4[%c0_38, %c0_39] : memref<96x14xf32, #tpu.memory_space<vmem>>, vector<96x14xf32>
    %cst_40 = arith.constant dense<0.000000e+00> : vector<8x14xf32>
    %144 = tpu.matmul %142, %143, %cst_40 {dimension_numbers = #tpu.dot_dimension_numbers<[1], [0], [0], [1], [0, 0, 1, 1], [], []>} : vector<8x96xf32>, vector<96x14xf32>, vector<8x14xf32> -> vector<8x14xf32>
    %c3 = arith.constant 3 : index
    %c0_41 = arith.constant 0 : index
    %145 = vector.load %arg5[%c3, %c0_41] : memref<4x96xf32, #tpu.memory_space<vmem>>, vector<1x14xf32>
    %146 = vector.broadcast %145 : vector<1x14xf32> to vector<8x14xf32>
    %147 = arith.addf %144, %146 : vector<8x14xf32>
    %148 = vector.extract_strided_slice %147 {offsets = [0, 0], sizes = [8, 4], strides = [1, 1]} : vector<8x14xf32> to vector<8x4xf32>
    %149 = vector.extract_strided_slice %147 {offsets = [0, 4], sizes = [8, 4], strides = [1, 1]} : vector<8x14xf32> to vector<8x4xf32>
    %150 = vector.extract_strided_slice %147 {offsets = [0, 8], sizes = [8, 6], strides = [1, 1]} : vector<8x14xf32> to vector<8x6xf32>
    %151 = vector.broadcast %8 : vector<8x1xf32> to vector<8x6xf32>
    %152 = arith.mulf %150, %151 : vector<8x6xf32>
    %cst_42 = arith.constant dense<0.000000e+00> : vector<6xf32>
    %153 = vector.multi_reduction <add>, %152, %cst_42 [0] : vector<8x6xf32> to vector<6xf32>
    %154 = vector.shape_cast %153 : vector<6xf32> to vector<1x6xf32>
    %155 = vector.broadcast %3 : f32 to vector<1x6xf32>
    %156 = arith.mulf %154, %155 : vector<1x6xf32>
    %157 = vector.extract_strided_slice %156 {offsets = [0, 0], sizes = [1, 1], strides = [1, 1]} : vector<1x6xf32> to vector<1x1xf32>
    %158 = vector.extract_strided_slice %156 {offsets = [0, 1], sizes = [1, 5], strides = [1, 1]} : vector<1x6xf32> to vector<1x5xf32>
    %159 = vector.extract_strided_slice %0 {offsets = [0, 90], sizes = [8, 1], strides = [1, 1]} : vector<8x100xf32> to vector<8x1xf32>
    %160 = vector.extract_strided_slice %0 {offsets = [0, 91], sizes = [8, 1], strides = [1, 1]} : vector<8x100xf32> to vector<8x1xf32>
    %161 = vector.extract_strided_slice %0 {offsets = [0, 92], sizes = [8, 5], strides = [1, 1]} : vector<8x100xf32> to vector<8x5xf32>
    %162 = vector.extract_strided_slice %0 {offsets = [0, 97], sizes = [8, 1], strides = [1, 1]} : vector<8x100xf32> to vector<8x1xf32>
    %163 = vector.extract_strided_slice %0 {offsets = [0, 98], sizes = [8, 1], strides = [1, 1]} : vector<8x100xf32> to vector<8x1xf32>
    %164 = vector.extract_strided_slice %0 {offsets = [0, 99], sizes = [8, 1], strides = [1, 1]} : vector<8x100xf32> to vector<8x1xf32>
    %cst_43 = arith.constant 1.000000e+00 : f32
    %165 = vector.broadcast %cst_43 : f32 to vector<8x1xf32>
    %166 = arith.divf %165, %162 : vector<8x1xf32>
    %167 = vector.broadcast %157 : vector<1x1xf32> to vector<8x1xf32>
    %168 = arith.subf %162, %167 : vector<8x1xf32>
    %cst_44 = arith.constant 1.000000e+00 : f32
    %169 = vector.broadcast %cst_44 : f32 to vector<8x1xf32>
    %170 = arith.divf %169, %168 : vector<8x1xf32>
    %171 = vector.extract_strided_slice %148 {offsets = [0, 0], sizes = [8, 1], strides = [1, 1]} : vector<8x4xf32> to vector<8x1xf32>
    %172 = vector.extract_strided_slice %148 {offsets = [0, 1], sizes = [8, 1], strides = [1, 1]} : vector<8x4xf32> to vector<8x1xf32>
    %173 = arith.mulf %172, %166 : vector<8x1xf32>
    %174 = arith.addf %171, %173 : vector<8x1xf32>
    %175 = vector.extract_strided_slice %148 {offsets = [0, 2], sizes = [8, 1], strides = [1, 1]} : vector<8x4xf32> to vector<8x1xf32>
    %176 = arith.mulf %175, %170 : vector<8x1xf32>
    %177 = arith.addf %174, %176 : vector<8x1xf32>
    %178 = vector.extract_strided_slice %148 {offsets = [0, 3], sizes = [8, 1], strides = [1, 1]} : vector<8x4xf32> to vector<8x1xf32>
    %179 = arith.mulf %159, %163 : vector<8x1xf32>
    %180 = math.log %179 : vector<8x1xf32>
    %181 = arith.mulf %178, %180 : vector<8x1xf32>
    %182 = arith.addf %177, %181 : vector<8x1xf32>
    %183 = arith.mulf %159, %182 : vector<8x1xf32>
    %184 = vector.extract_strided_slice %149 {offsets = [0, 0], sizes = [8, 1], strides = [1, 1]} : vector<8x4xf32> to vector<8x1xf32>
    %185 = vector.extract_strided_slice %149 {offsets = [0, 1], sizes = [8, 1], strides = [1, 1]} : vector<8x4xf32> to vector<8x1xf32>
    %186 = arith.mulf %185, %166 : vector<8x1xf32>
    %187 = arith.addf %184, %186 : vector<8x1xf32>
    %188 = vector.extract_strided_slice %149 {offsets = [0, 2], sizes = [8, 1], strides = [1, 1]} : vector<8x4xf32> to vector<8x1xf32>
    %189 = arith.mulf %188, %170 : vector<8x1xf32>
    %190 = arith.addf %187, %189 : vector<8x1xf32>
    %191 = vector.extract_strided_slice %149 {offsets = [0, 3], sizes = [8, 1], strides = [1, 1]} : vector<8x4xf32> to vector<8x1xf32>
    %192 = arith.mulf %160, %164 : vector<8x1xf32>
    %193 = math.log %192 : vector<8x1xf32>
    %194 = arith.mulf %191, %193 : vector<8x1xf32>
    %195 = arith.addf %190, %194 : vector<8x1xf32>
    %196 = arith.mulf %160, %195 : vector<8x1xf32>
    %197 = vector.broadcast %158 : vector<1x5xf32> to vector<8x5xf32>
    %198 = arith.mulf %161, %197 : vector<8x5xf32>
    %cst_45 = arith.constant dense<0.000000e+00> : vector<8xf32>
    %199 = vector.multi_reduction <add>, %198, %cst_45 [1] : vector<8x5xf32> to vector<8xf32>
    %200 = vector.shape_cast %199 : vector<8xf32> to vector<8x1xf32>
    %201 = arith.addf %183, %196 : vector<8x1xf32>
    %202 = arith.mulf %159, %160 : vector<8x1xf32>
    %203 = arith.mulf %202, %200 : vector<8x1xf32>
    %204 = arith.addf %201, %203 : vector<8x1xf32>
    %c0_46 = arith.constant 0 : index
    %c0_47 = arith.constant 0 : index
    %205 = vector.load %arg6[%c0_46, %c0_47] : memref<8x1xf32, #tpu.memory_space<vmem>>, vector<8x1xf32>
    tpu.vector_store %arg6[%c0_46, %c0_47], %204 {strides = array<i32>} : memref<8x1xf32, #tpu.memory_space<vmem>>, vector<8x1xf32>,
    return
  }
}

</mosaic_0001>

<llo_original>
// kernel: tpu_custom_call.1
$region0: #{tpu_custom_call.1}
  #allocation0 [shape = 'u32[]', space=smem, size = 0x4, offset = 0x4, fixed_abs, tag = 'smem constant byte address 0x4 - core index']
  #allocation1 [shape = 'u32[144,128]{1,0:T(1,128)}', space=vmem, size = 0x12000, scoped, tag = 'internal scratch']
  #allocation2 [shape = 's32[1]{0:T(128)S(6)}', space=smem, size = 0x200, scoped, tag = 'scoped memory for tpu_custom_call.1']
  %s0 = inlined_call_operand.<no memory space> [shape: s32[1], index: 0, kind: input, shape index: {}]
  %s1 = inlined_call_operand.vmem [shape: f32[8,100], index: 1, kind: input, shape index: {}]
  %s2 = inlined_call_operand.vmem [shape: f32[100,96], index: 2, kind: input, shape index: {}]
  %s3 = inlined_call_operand.vmem [shape: f32[192,96], index: 3, kind: input, shape index: {}]
  %s4 = inlined_call_operand.vmem [shape: f32[96,14], index: 4, kind: input, shape index: {}]
  %s5 = inlined_call_operand.vmem [shape: f32[4,96], index: 5, kind: input, shape index: {}]
  %s6 = inlined_call_operand.vmem [shape: f32[8,1], index: 6, kind: output, shape index: {}]
  %s7 = sld [smem:[#allocation0]]
  $region34: #{tpu_custom_call.1} parent=0
    _
  %s9 = ssub.s32 1, %s7
  %s10 = scalar_select 0, %s9, %s7
  %11 = sst [smem:[#allocation2]] %s0
  // Predicated region
  $region2: #{tpu_custom_call.1} parent=0 // pred_check
    _
  $region3: #{tpu_custom_call.1} parent=0 // pred_check_branch
    %13 = sbr.rel (0) target = $region5
  $region4: #{tpu_custom_call.1} parent=0 // pred_region
    _
  $region5: #{tpu_custom_call.1} parent=0 // pred_fallthru
    _
  // Predicated region
  $region6: #{tpu_custom_call.1} parent=0 // pred_check
    _
  $region7: #{tpu_custom_call.1} parent=0 // pred_check_branch
    %15 = sbr.rel (0) target = $region9
  $region8: #{tpu_custom_call.1} parent=0 // pred_region
    _
  $region9: #{tpu_custom_call.1} parent=0 // pred_fallthru
    _
  // Predicated region
  $region10: #{tpu_custom_call.1} parent=0 // pred_check
    _
  $region11: #{tpu_custom_call.1} parent=0 // pred_check_branch
    %17 = sbr.rel (0) target = $region13
  $region12: #{tpu_custom_call.1} parent=0 // pred_region
    _
  $region13: #{tpu_custom_call.1} parent=0 // pred_fallthru
    _
  // Predicated region
  $region14: #{tpu_custom_call.1} parent=0 // pred_check
    _
  $region15: #{tpu_custom_call.1} parent=0 // pred_check_branch
    %19 = sbr.rel (0) target = $region17
  $region16: #{tpu_custom_call.1} parent=0 // pred_region
    _
  $region17: #{tpu_custom_call.1} parent=0 // pred_fallthru
    _
  // Predicated region
  $region18: #{tpu_custom_call.1} parent=0 // pred_check
    _
  $region19: #{tpu_custom_call.1} parent=0 // pred_check_branch
    %21 = sbr.rel (0) target = $region21
  $region20: #{tpu_custom_call.1} parent=0 // pred_region
    _
  $region21: #{tpu_custom_call.1} parent=0 // pred_fallthru
    _
  // Predicated region
  $region22: #{tpu_custom_call.1} parent=0 // pred_check
    _
  $region23: #{tpu_custom_call.1} parent=0 // pred_check_branch
    %23 = sbr.rel (0) target = $region25
  $region24: #{tpu_custom_call.1} parent=0 // pred_region
    _
  $region25: #{tpu_custom_call.1} parent=0 // pred_fallthru
    _
  %v24 = vld [vmem:[%s1] sm:$0xff]
  %s25 = sld [smem:[#allocation2]]
  %s26 = scvt.s32.f32 %s25
  %v27 = vstv %s26
  %v28 = vrcp.pop %v27
  %s29 = vtos %v28
  %v30 = vlaneseq
  %v31 = vshrl.u32 %v30, 7
  %v32 = vstv %s25
  %vm33 = vcmp.lt.s32.totalorder %v31, %v32
  %v34 = vsel %vm33, 1, 0
  %v35 = vcvt.s32.f32 %v34
  %v36 = vmul.f32 %v24, %v35
  %vm37 = vcmask 818176
  %v38 = vsel %vm37, %v36, 0.0
  %v39 = vrot.slane %v38, 4
  %v40 = vadd.f32 %v38, %v39
  %v41 = vrot.slane %v40, 2
  %v42 = vadd.f32 %v40, %v41
  %v43 = vrot.slane %v42, 1
  %v44 = vadd.f32 %v42, %v43
  %v45 = vstv %s29
  %v46 = vmul.f32 %v44, %v45
  %v47 = vmul.f32 %v36, %v24
  %v48 = vsel %vm37, %v47, 0.0
  %v49 = vrot.slane %v48, 4
  %v50 = vadd.f32 %v48, %v49
  %v51 = vrot.slane %v50, 2
  %v52 = vadd.f32 %v50, %v51
  %v53 = vrot.slane %v52, 1
  %v54 = vadd.f32 %v52, %v53
  %v55 = vmul.f32 %v54, %v45
  %v56 = vmul.f32 %v46, %v46
  %v57 = vsub.f32 %v55, %v56
  %v58 = vsub.f32 %v24, %v46
  %v59 = vadd.f32 %v57, 1e-05
  %v60 = vrsqrt.pop %v59
  %v61 = vmul.f32 %v58, %v60
  %v62 = vld [vmem:[%s2] sm:$0xff]
  %v63 = vld [vmem:[%s2 + $0x8] sm:$0xff]
  %v64 = vld [vmem:[%s2 + $0x10] sm:$0xff]
  %v65 = vld [vmem:[%s2 + $0x18] sm:$0xff]
  %v66 = vld [vmem:[%s2 + $0x20] sm:$0xff]
  %v67 = vld [vmem:[%s2 + $0x28] sm:$0xff]
  %v68 = vld [vmem:[%s2 + $0x30] sm:$0xff]
  %v69 = vld [vmem:[%s2 + $0x38] sm:$0xff]
  %v70 = vld [vmem:[%s2 + $0x40] sm:$0xff]
  %v71 = vld [vmem:[%s2 + $0x48] sm:$0xff]
  %v72 = vld [vmem:[%s2 + $0x50] sm:$0xff]
  %v73 = vld [vmem:[%s2 + $0x58] sm:$0xff]
  %v74 = vld [vmem:[%s2 + $0x60] sm:$0xf]
  %v75 = vld [vmem:[%s5] sm:$0x1]
  %v76 = vlaneseq
  %v77 = vshrl.u32 %v76, 7
  %v78 = vsub.s32 0, %v77
  %v79 = vrot.slane %v75, %v78
  %v81 = vsel %vm37, %v61, 0
  %vm83 = vcmask 1043456
  %v85 = vsel %vm83, %v74, 0
  %87 = vmatprep.subr.mxu0 0.0
  %88 = vmatpush1.msra.mxu0 %v62
  %89 = vmatprep.subr.mxu0 0.0
  %90 = vmatpush1.msra.mxu0 %v63
  %91 = vmatprep.subr.mxu0 0.0
  %92 = vmatpush1.msra.mxu0 %v64
  %93 = vmatprep.subr.mxu0 0.0
  %94 = vmatpush1.msra.mxu0 %v65
  %95 = vmatprep.subr.mxu0 0.0
  %96 = vmatpush1.msra.mxu0 %v66
  %97 = vmatprep.subr.mxu0 0.0
  %98 = vmatpush1.msra.mxu0 %v67
  %99 = vmatprep.subr.mxu0 0.0
  %100 = vmatpush1.msra.mxu0 %v68
  %101 = vmatprep.subr.mxu0 0.0
  %102 = vmatpush1.msra.mxu0 %v69
  %103 = vmatprep.subr.mxu0 0.0
  %104 = vmatpush1.msra.mxu0 %v70
  %105 = vmatprep.subr.mxu0 0.0
  %106 = vmatpush1.msra.mxu0 %v71
  %107 = vmatprep.subr.mxu0 0.0
  %108 = vmatpush1.msra.mxu0 %v72
  %109 = vmatprep.subr.mxu0 0.0
  %110 = vmatpush1.msra.mxu0 %v73
  %111 = vmatprep.subr.mxu0 0.0
  %112 = vmatpush1.msra.mxu0 %v85
  %113 = vmatprep.subr.mxu0 0.0
  %114 = vmatpush1.msra.mxu0 0.0
  %115 = vmatprep.subr.mxu0 0.0
  %116 = vmatpush1.msra.mxu0 0.0
  %117 = vmatprep.subr.mxu0 0.0
  %118 = vmatpush1.msra.mxu0 0.0
  %119 = vmatprep.subr.mxu0 0.0
  %120 = vmatpush1.msra.mxu0 0.0
  %121 = vmatprep.subr.mxu0 0.0
  %122 = vmatpush1.msra.mxu0 0.0
  %123 = vmatprep.subr.mxu0 0.0
  %124 = vmatpush1.msra.mxu0 0.0
  %125 = vmatprep.subr.mxu0 0.0
  %126 = vmatpush1.msra.mxu0 0.0
  %127 = vmatprep.subr.mxu0 0.0
  %128 = vmatpush1.msra.mxu0 0.0
  %129 = vmatprep.subr.mxu0 0.0
  %130 = vmatpush1.msra.mxu0 0.0
  %131 = vmatprep.subr.mxu0 0.0
  %132 = vmatpush1.msra.mxu0 0.0
  %133 = vmatprep.subr.mxu0 0.0
  %134 = vmatpush1.msra.mxu0 0.0
  %135 = vmatprep.subr.mxu0 0.0
  %136 = vmatpush1.msra.mxu0 0.0
  %137 = vmatprep.subr.mxu0 0.0
  %138 = vmatpush1.msra.mxu0 0.0
  %139 = vmatprep.subr.mxu0 0.0
  %140 = vmatpush1.msra.mxu0 0.0
  %141 = vmatprep.subr.mxu0 0.0
  %142 = vmatpush1.msra.mxu0 0.0
  %143 = vmatprep.subr.mxu0 0.0
  %144 = vmatpush1.msra.mxu0 0.0
  %145 = vmatprep.subr.mxu0 0.0
  %146 = vmatpush1.msra.mxu0 0.0
  %147 = vmatprep.subr.mxu0 0.0
  %148 = vmatpush1.msra.mxu0 0.0
  %149 = vmatprep.subr.mxu0 0.0
  %150 = vmatpush1.msra.mxu0 0.0
  %151 = vmatprep.mubr.f32.mxu0 0.0
  %152 = vmatmul.mubr.f32.gmra.mrb[0].mxu0 %v81
  %v153 = vpop.f32.mrb[0].mxu0
  %v154 = vadd.f32 %v79, %v153
  %v155 = vpop.f32.mrb[0].mxu0
  %156 = vdwg.mxu0
  %v157 = vmul.f32 %v154, 0.5
  %v158 = vmul.f32 %v154, 0.70710677
  %v159 = verf.f32.pop %v158
  %v160 = vadd.f32 %v159, 1.0
  %v161 = vmul.f32 %v157, %v160
  %v162 = vmul.f32 %v161, %v35
  %vm163 = vcmask 785408
  %v164 = vsel %vm163, %v162, 0.0
  %v165 = vrot.slane %v164, 4
  %v166 = vadd.f32 %v164, %v165
  %v167 = vrot.slane %v166, 2
  %v168 = vadd.f32 %v166, %v167
  %v169 = vrot.slane %v168, 1
  %v170 = vadd.f32 %v168, %v169
  %v171 = vmul.f32 %v170, %v45
  %v172 = vmul.f32 %v162, %v161
  %v173 = vsel %vm163, %v172, 0.0
  %v174 = vrot.slane %v173, 4
  %v175 = vadd.f32 %v173, %v174
  %v176 = vrot.slane %v175, 2
  %v177 = vadd.f32 %v175, %v176
  %v178 = vrot.slane %v177, 1
  %v179 = vadd.f32 %v177, %v178
  %v180 = vmul.f32 %v179, %v45
  %v181 = vmul.f32 %v171, %v171
  %v182 = vsub.f32 %v180, %v181
  %v183 = vsub.f32 %v161, %v171
  %v184 = vadd.f32 %v182, 1e-05
  %v185 = vrsqrt.pop %v184
  %v186 = vmul.f32 %v183, %v185
  %v187 = vld [vmem:[%s3] sm:$0xff]
  %v188 = vld [vmem:[%s3 + $0x8] sm:$0xff]
  %v189 = vld [vmem:[%s3 + $0x10] sm:$0xff]
  %v190 = vld [vmem:[%s3 + $0x18] sm:$0xff]
  %v191 = vld [vmem:[%s3 + $0x20] sm:$0xff]
  %v192 = vld [vmem:[%s3 + $0x28] sm:$0xff]
  %v193 = vld [vmem:[%s3 + $0x30] sm:$0xff]
  %v194 = vld [vmem:[%s3 + $0x38] sm:$0xff]
  %v195 = vld [vmem:[%s3 + $0x40] sm:$0xff]
  %v196 = vld [vmem:[%s3 + $0x48] sm:$0xff]
  %v197 = vld [vmem:[%s3 + $0x50] sm:$0xff]
  %v198 = vld [vmem:[%s3 + $0x58] sm:$0xff]
  %v199 = vld [vmem:[%s5 + $0x1] sm:$0x1]
  %v200 = vlaneseq
  %v201 = vshrl.u32 %v200, 7
  %v202 = vsub.s32 0, %v201
  %v203 = vrot.slane %v199, %v202
  %v205 = vsel %vm163, %v186, 0
  %207 = vmatprep.subr.mxu0 0.0
  %208 = vmatpush1.msra.mxu0 %v187
  %209 = vmatprep.subr.mxu0 0.0
  %210 = vmatpush1.msra.mxu0 %v188
  %211 = vmatprep.subr.mxu0 0.0
  %212 = vmatpush1.msra.mxu0 %v189
  %213 = vmatprep.subr.mxu0 0.0
  %214 = vmatpush1.msra.mxu0 %v190
  %215 = vmatprep.subr.mxu0 0.0
  %216 = vmatpush1.msra.mxu0 %v191
  %217 = vmatprep.subr.mxu0 0.0
  %218 = vmatpush1.msra.mxu0 %v192
  %219 = vmatprep.subr.mxu0 0.0
  %220 = vmatpush1.msra.mxu0 %v193
  %221 = vmatprep.subr.mxu0 0.0
  %222 = vmatpush1.msra.mxu0 %v194
  %223 = vmatprep.subr.mxu0 0.0
  %224 = vmatpush1.msra.mxu0 %v195
  %225 = vmatprep.subr.mxu0 0.0
  %226 = vmatpush1.msra.mxu0 %v196
  %227 = vmatprep.subr.mxu0 0.0
  %228 = vmatpush1.msra.mxu0 %v197
  %229 = vmatprep.subr.mxu0 0.0
  %230 = vmatpush1.msra.mxu0 %v198
  %231 = vmatprep.subr.mxu0 0.0
  %232 = vmatpush1.msra.mxu0 0.0
  %233 = vmatprep.subr.mxu0 0.0
  %234 = vmatpush1.msra.mxu0 0.0
  %235 = vmatprep.subr.mxu0 0.0
  %236 = vmatpush1.msra.mxu0 0.0
  %237 = vmatprep.subr.mxu0 0.0
  %238 = vmatpush1.msra.mxu0 0.0
  %239 = vmatprep.subr.mxu0 0.0
  %240 = vmatpush1.msra.mxu0 0.0
  %241 = vmatprep.subr.mxu0 0.0
  %242 = vmatpush1.msra.mxu0 0.0
  %243 = vmatprep.subr.mxu0 0.0
  %244 = vmatpush1.msra.mxu0 0.0
  %245 = vmatprep.subr.mxu0 0.0
  %246 = vmatpush1.msra.mxu0 0.0
  %247 = vmatprep.subr.mxu0 0.0
  %248 = vmatpush1.msra.mxu0 0.0
  %249 = vmatprep.subr.mxu0 0.0
  %250 = vmatpush1.msra.mxu0 0.0
  %251 = vmatprep.subr.mxu0 0.0
  %252 = vmatpush1.msra.mxu0 0.0
  %253 = vmatprep.subr.mxu0 0.0
  %254 = vmatpush1.msra.mxu0 0.0
  %255 = vmatprep.subr.mxu0 0.0
  %256 = vmatpush1.msra.mxu0 0.0
  %257 = vmatprep.subr.mxu0 0.0
  %258 = vmatpush1.msra.mxu0 0.0
  %259 = vmatprep.subr.mxu0 0.0
  %260 = vmatpush1.msra.mxu0 0.0
  %261 = vmatprep.subr.mxu0 0.0
  %262 = vmatpush1.msra.mxu0 0.0
  %263 = vmatprep.subr.mxu0 0.0
  %264 = vmatpush1.msra.mxu0 0.0
  %265 = vmatprep.subr.mxu0 0.0
  %266 = vmatpush1.msra.mxu0 0.0
  %267 = vmatprep.subr.mxu0 0.0
  %268 = vmatpush1.msra.mxu0 0.0
  %269 = vmatprep.subr.mxu0 0.0
  %270 = vmatpush1.msra.mxu0 0.0
  %271 = vmatprep.mubr.f32.mxu0 0.0
  %272 = vmatmul.mubr.f32.gmra.mrb[0].mxu0 %v205
  %v273 = vpop.f32.mrb[0].mxu0
  %v274 = vadd.f32 %v203, %v273
  %v275 = vpop.f32.mrb[0].mxu0
  %276 = vdwg.mxu0
  %v277 = vmul.f32 %v274, 0.5
  %v278 = vmul.f32 %v274, 0.70710677
  %v279 = verf.f32.pop %v278
  %v280 = vadd.f32 %v279, 1.0
  %v281 = vmul.f32 %v277, %v280
  %v282 = vmul.f32 %v281, %v35
  %v283 = vsel %vm163, %v282, 0.0
  %v284 = vrot.slane %v283, 4
  %v285 = vadd.f32 %v283, %v284
  %v286 = vrot.slane %v285, 2
  %v287 = vadd.f32 %v285, %v286
  %v288 = vrot.slane %v287, 1
  %v289 = vadd.f32 %v287, %v288
  %v290 = vmul.f32 %v289, %v45
  %v291 = vmul.f32 %v282, %v281
  %v292 = vsel %vm163, %v291, 0.0
  %v293 = vrot.slane %v292, 4
  %v294 = vadd.f32 %v292, %v293
  %v295 = vrot.slane %v294, 2
  %v296 = vadd.f32 %v294, %v295
  %v297 = vrot.slane %v296, 1
  %v298 = vadd.f32 %v296, %v297
  %v299 = vmul.f32 %v298, %v45
  %v300 = vmul.f32 %v290, %v290
  %v301 = vsub.f32 %v299, %v300
  %v302 = vsub.f32 %v281, %v290
  %v303 = vadd.f32 %v301, 1e-05
  %v304 = vrsqrt.pop %v303
  %v305 = vmul.f32 %v302, %v304
  %v306 = vld [vmem:[%s3 + $0x60] sm:$0xff]
  %v307 = vld [vmem:[%s3 + $0x68] sm:$0xff]
  %v308 = vld [vmem:[%s3 + $0x70] sm:$0xff]
  %v309 = vld [vmem:[%s3 + $0x78] sm:$0xff]
  %v310 = vld [vmem:[%s3 + $0x80] sm:$0xff]
  %v311 = vld [vmem:[%s3 + $0x88] sm:$0xff]
  %v312 = vld [vmem:[%s3 + $0x90] sm:$0xff]
  %v313 = vld [vmem:[%s3 + $0x98] sm:$0xff]
  %v314 = vld [vmem:[%s3 + $0xa0] sm:$0xff]
  %v315 = vld [vmem:[%s3 + $0xa8] sm:$0xff]
  %v316 = vld [vmem:[%s3 + $0xb0] sm:$0xff]
  %v317 = vld [vmem:[%s3 + $0xb8] sm:$0xff]
  %v318 = vld [vmem:[%s5 + $0x2] sm:$0x1]
  %v319 = vlaneseq
  %v320 = vshrl.u32 %v319, 7
  %v321 = vsub.s32 0, %v320
  %v322 = vrot.slane %v318, %v321
  %v324 = vsel %vm163, %v305, 0
  %326 = vmatprep.subr.mxu0 0.0
  %327 = vmatpush1.msra.mxu0 %v306
  %328 = vmatprep.subr.mxu0 0.0
  %329 = vmatpush1.msra.mxu0 %v307
  %330 = vmatprep.subr.mxu0 0.0
  %331 = vmatpush1.msra.mxu0 %v308
  %332 = vmatprep.subr.mxu0 0.0
  %333 = vmatpush1.msra.mxu0 %v309
  %334 = vmatprep.subr.mxu0 0.0
  %335 = vmatpush1.msra.mxu0 %v310
  %336 = vmatprep.subr.mxu0 0.0
  %337 = vmatpush1.msra.mxu0 %v311
  %338 = vmatprep.subr.mxu0 0.0
  %339 = vmatpush1.msra.mxu0 %v312
  %340 = vmatprep.subr.mxu0 0.0
  %341 = vmatpush1.msra.mxu0 %v313
  %342 = vmatprep.subr.mxu0 0.0
  %343 = vmatpush1.msra.mxu0 %v314
  %344 = vmatprep.subr.mxu0 0.0
  %345 = vmatpush1.msra.mxu0 %v315
  %346 = vmatprep.subr.mxu0 0.0
  %347 = vmatpush1.msra.mxu0 %v316
  %348 = vmatprep.subr.mxu0 0.0
  %349 = vmatpush1.msra.mxu0 %v317
  %350 = vmatprep.subr.mxu0 0.0
  %351 = vmatpush1.msra.mxu0 0.0
  %352 = vmatprep.subr.mxu0 0.0
  %353 = vmatpush1.msra.mxu0 0.0
  %354 = vmatprep.subr.mxu0 0.0
  %355 = vmatpush1.msra.mxu0 0.0
  %356 = vmatprep.subr.mxu0 0.0
  %357 = vmatpush1.msra.mxu0 0.0
  %358 = vmatprep.subr.mxu0 0.0
  %359 = vmatpush1.msra.mxu0 0.0
  %360 = vmatprep.subr.mxu0 0.0
  %361 = vmatpush1.msra.mxu0 0.0
  %362 = vmatprep.subr.mxu0 0.0
  %363 = vmatpush1.msra.mxu0 0.0
  %364 = vmatprep.subr.mxu0 0.0
  %365 = vmatpush1.msra.mxu0 0.0
  %366 = vmatprep.subr.mxu0 0.0
  %367 = vmatpush1.msra.mxu0 0.0
  %368 = vmatprep.subr.mxu0 0.0
  %369 = vmatpush1.msra.mxu0 0.0
  %370 = vmatprep.subr.mxu0 0.0
  %371 = vmatpush1.msra.mxu0 0.0
  %372 = vmatprep.subr.mxu0 0.0
  %373 = vmatpush1.msra.mxu0 0.0
  %374 = vmatprep.subr.mxu0 0.0
  %375 = vmatpush1.msra.mxu0 0.0
  %376 = vmatprep.subr.mxu0 0.0
  %377 = vmatpush1.msra.mxu0 0.0
  %378 = vmatprep.subr.mxu0 0.0
  %379 = vmatpush1.msra.mxu0 0.0
  %380 = vmatprep.subr.mxu0 0.0
  %381 = vmatpush1.msra.mxu0 0.0
  %382 = vmatprep.subr.mxu0 0.0
  %383 = vmatpush1.msra.mxu0 0.0
  %384 = vmatprep.subr.mxu0 0.0
  %385 = vmatpush1.msra.mxu0 0.0
  %386 = vmatprep.subr.mxu0 0.0
  %387 = vmatpush1.msra.mxu0 0.0
  %388 = vmatprep.subr.mxu0 0.0
  %389 = vmatpush1.msra.mxu0 0.0
  %390 = vmatprep.mubr.f32.mxu0 0.0
  %391 = vmatmul.mubr.f32.gmra.mrb[0].mxu0 %v324
  %v392 = vpop.f32.mrb[0].mxu0
  %v393 = vadd.f32 %v322, %v392
  %v394 = vpop.f32.mrb[0].mxu0
  %395 = vdwg.mxu0
  %v396 = vmul.f32 %v393, 0.5
  %v397 = vmul.f32 %v393, 0.70710677
  %v398 = verf.f32.pop %v397
  %v399 = vadd.f32 %v398, 1.0
  %v400 = vmul.f32 %v396, %v399
  %v401 = vmul.f32 %v400, %v35
  %v402 = vsel %vm163, %v401, 0.0
  %v403 = vrot.slane %v402, 4
  %v404 = vadd.f32 %v402, %v403
  %v405 = vrot.slane %v404, 2
  %v406 = vadd.f32 %v404, %v405
  %v407 = vrot.slane %v406, 1
  %v408 = vadd.f32 %v406, %v407
  %v409 = vmul.f32 %v408, %v45
  %v410 = vmul.f32 %v401, %v400
  %v411 = vsel %vm163, %v410, 0.0
  %v412 = vrot.slane %v411, 4
  %v413 = vadd.f32 %v411, %v412
  %v414 = vrot.slane %v413, 2
  %v415 = vadd.f32 %v413, %v414
  %v416 = vrot.slane %v415, 1
  %v417 = vadd.f32 %v415, %v416
  %v418 = vmul.f32 %v417, %v45
  %v419 = vmul.f32 %v409, %v409
  %v420 = vsub.f32 %v418, %v419
  %v421 = vsub.f32 %v400, %v409
  %v422 = vadd.f32 %v420, 1e-05
  %v423 = vrsqrt.pop %v422
  %v424 = vmul.f32 %v421, %v423
  %v425 = vld [vmem:[%s4] sm:$0xff]
  %v426 = vld [vmem:[%s4 + $0x8] sm:$0xff]
  %v427 = vld [vmem:[%s4 + $0x10] sm:$0xff]
  %v428 = vld [vmem:[%s4 + $0x18] sm:$0xff]
  %v429 = vld [vmem:[%s4 + $0x20] sm:$0xff]
  %v430 = vld [vmem:[%s4 + $0x28] sm:$0xff]
  %v431 = vld [vmem:[%s4 + $0x30] sm:$0xff]
  %v432 = vld [vmem:[%s4 + $0x38] sm:$0xff]
  %v433 = vld [vmem:[%s4 + $0x40] sm:$0xff]
  %v434 = vld [vmem:[%s4 + $0x48] sm:$0xff]
  %v435 = vld [vmem:[%s4 + $0x50] sm:$0xff]
  %v436 = vld [vmem:[%s4 + $0x58] sm:$0xff]
  %v437 = vld [vmem:[%s5 + $0x3] sm:$0x1]
  %v438 = vlaneseq
  %v439 = vshrl.u32 %v438, 7
  %v440 = vsub.s32 0, %v439
  %v441 = vrot.slane %v437, %v440
  %v443 = vsel %vm163, %v424, 0
  %445 = vmatprep.subr.mxu0 0.0
  %446 = vmatpush1.msra.mxu0 %v425
  %447 = vmatprep.subr.mxu0 0.0
  %448 = vmatpush1.msra.mxu0 %v426
  %449 = vmatprep.subr.mxu0 0.0
  %450 = vmatpush1.msra.mxu0 %v427
  %451 = vmatprep.subr.mxu0 0.0
  %452 = vmatpush1.msra.mxu0 %v428
  %453 = vmatprep.subr.mxu0 0.0
  %454 = vmatpush1.msra.mxu0 %v429
  %455 = vmatprep.subr.mxu0 0.0
  %456 = vmatpush1.msra.mxu0 %v430
  %457 = vmatprep.subr.mxu0 0.0
  %458 = vmatpush1.msra.mxu0 %v431
  %459 = vmatprep.subr.mxu0 0.0
  %460 = vmatpush1.msra.mxu0 %v432
  %461 = vmatprep.subr.mxu0 0.0
  %462 = vmatpush1.msra.mxu0 %v433
  %463 = vmatprep.subr.mxu0 0.0
  %464 = vmatpush1.msra.mxu0 %v434
  %465 = vmatprep.subr.mxu0 0.0
  %466 = vmatpush1.msra.mxu0 %v435
  %467 = vmatprep.subr.mxu0 0.0
  %468 = vmatpush1.msra.mxu0 %v436
  %469 = vmatprep.subr.mxu0 0.0
  %470 = vmatpush1.msra.mxu0 0.0
  %471 = vmatprep.subr.mxu0 0.0
  %472 = vmatpush1.msra.mxu0 0.0
  %473 = vmatprep.subr.mxu0 0.0
  %474 = vmatpush1.msra.mxu0 0.0
  %475 = vmatprep.subr.mxu0 0.0
  %476 = vmatpush1.msra.mxu0 0.0
  %477 = vmatprep.subr.mxu0 0.0
  %478 = vmatpush1.msra.mxu0 0.0
  %479 = vmatprep.subr.mxu0 0.0
  %480 = vmatpush1.msra.mxu0 0.0
  %481 = vmatprep.subr.mxu0 0.0
  %482 = vmatpush1.msra.mxu0 0.0
  %483 = vmatprep.subr.mxu0 0.0
  %484 = vmatpush1.msra.mxu0 0.0
  %485 = vmatprep.subr.mxu0 0.0
  %486 = vmatpush1.msra.mxu0 0.0
  %487 = vmatprep.subr.mxu0 0.0
  %488 = vmatpush1.msra.mxu0 0.0
  %489 = vmatprep.subr.mxu0 0.0
  %490 = vmatpush1.msra.mxu0 0.0
  %491 = vmatprep.subr.mxu0 0.0
  %492 = vmatpush1.msra.mxu0 0.0
  %493 = vmatprep.subr.mxu0 0.0
  %494 = vmatpush1.msra.mxu0 0.0
  %495 = vmatprep.subr.mxu0 0.0
  %496 = vmatpush1.msra.mxu0 0.0
  %497 = vmatprep.subr.mxu0 0.0
  %498 = vmatpush1.msra.mxu0 0.0
  %499 = vmatprep.subr.mxu0 0.0
  %500 = vmatpush1.msra.mxu0 0.0
  %501 = vmatprep.subr.mxu0 0.0
  %502 = vmatpush1.msra.mxu0 0.0
  %503 = vmatprep.subr.mxu0 0.0
  %504 = vmatpush1.msra.mxu0 0.0
  %505 = vmatprep.subr.mxu0 0.0
  %506 = vmatpush1.msra.mxu0 0.0
  %507 = vmatprep.subr.mxu0 0.0
  %508 = vmatpush1.msra.mxu0 0.0
  %509 = vmatprep.mubr.f32.mxu0 0.0
  %510 = vmatmul.mubr.f32.gmra.mrb[0].mxu0 %v443
  %v511 = vpop.f32.mrb[0].mxu0
  %v512 = vadd.f32 %v441, %v511
  %v513 = vpop.f32.mrb[0].mxu0
  %514 = vdwg.mxu0
  %v515 = vmul.f32 %v512, %v35
  %vm516 = vcmask 113728
  %v517 = vsel %vm516, %v515, 0.0
  %v518 = vrot.slane %v517, 4
  %v519 = vadd.f32 %v517, %v518
  %v520 = vrot.slane %v519, 2
  %v521 = vadd.f32 %v519, %v520
  %v522 = vrot.slane %v521, 1
  %v523 = vadd.f32 %v521, %v522
  %v524 = vmul.f32 %v523, %v45
  %v525 = vrcp.pop %v24
  %v526 = vmul.f32 1.0, %v525
  %528 = vrot.lane.b32.xlu0 %v524, 89
  %v529 = vpop.permute.xlu0 %528
  %v531 = vsub.f32 %v24, %v529
  %v532 = vrcp.pop %v531
  %v533 = vmul.f32 1.0, %v532
  %535 = vrot.lane.b32.xlu0 %v526, 32
  %v536 = vpop.permute.xlu0 %535
  %v538 = vmul.f32 %v512, %v536
  %540 = vrot.lane.b32.xlu0 %v538, 127
  %v541 = vpop.permute.xlu0 %540
  %v543 = vadd.f32 %v512, %v541
  %545 = vrot.lane.b32.xlu0 %v533, 33
  %v546 = vpop.permute.xlu0 %545
  %v548 = vmul.f32 %v512, %v546
  %550 = vrot.lane.b32.xlu0 %v548, 126
  %v551 = vpop.permute.xlu0 %550
  %v553 = vadd.f32 %v543, %v551
  %555 = vrot.lane.b32.xlu0 %v24, 120
  %v556 = vpop.permute.xlu0 %555
  %v558 = vmul.f32 %v24, %v556
  %v559 = vlog2.pop %v558
  %v560 = vmul.f32 %v559, 0.6931472
  %562 = vrot.lane.b32.xlu0 %v560, 41
  %v563 = vpop.permute.xlu0 %562
  %v565 = vmul.f32 %v512, %v563
  %567 = vrot.lane.b32.xlu0 %v565, 125
  %v568 = vpop.permute.xlu0 %567
  %v570 = vadd.f32 %v553, %v568
  %572 = vrot.lane.b32.xlu0 %v570, 90
  %v573 = vpop.permute.xlu0 %572
  %v575 = vmul.f32 %v24, %v573
  %576 = vrot.lane.b32.xlu0 %v526, 36
  %v577 = vpop.permute.xlu0 %576
  %v579 = vmul.f32 %v512, %v577
  %581 = vrot.lane.b32.xlu0 %v579, 127
  %v582 = vpop.permute.xlu0 %581
  %v584 = vadd.f32 %v512, %v582
  %585 = vrot.lane.b32.xlu0 %v533, 37
  %v586 = vpop.permute.xlu0 %585
  %v588 = vmul.f32 %v512, %v586
  %590 = vrot.lane.b32.xlu0 %v588, 126
  %v591 = vpop.permute.xlu0 %590
  %v593 = vadd.f32 %v584, %v591
  %594 = vrot.lane.b32.xlu0 %v560, 44
  %v595 = vpop.permute.xlu0 %594
  %v597 = vmul.f32 %v512, %v595
  %599 = vrot.lane.b32.xlu0 %v597, 125
  %v600 = vpop.permute.xlu0 %599
  %v602 = vadd.f32 %v593, %v600
  %604 = vrot.lane.b32.xlu0 %v602, 87
  %v605 = vpop.permute.xlu0 %604
  %v607 = vmul.f32 %v24, %v605
  %608 = vrot.lane.b32.xlu0 %v524, 83
  %v609 = vpop.permute.xlu0 %608
  %v611 = vmul.f32 %v24, %v609
  %613 = vrot.lane.b32.xlu0 %v611, 36
  %v614 = vpop.permute.xlu0 %613
  %vm616 = vcmask 39936
  %v617 = vsel %vm616, %v614, 0.0
  %618 = vadd.xlane.f32.xlu0 %v617
  %v619 = vpop.xlane.xlu0 %618
  %621 = vrot.lane.b32.xlu0 %v607, 127
  %v622 = vpop.permute.xlu0 %621
  %v624 = vadd.f32 %v575, %v622
  %625 = vrot.lane.b32.xlu0 %v24, 127
  %v626 = vpop.permute.xlu0 %625
  %v628 = vmul.f32 %v24, %v626
  %v629 = vmul.f32 %v628, %v619
  %v630 = vadd.f32 %v624, %v629
  %632 = vrot.lane.b32.xlu0 %v630, 38
  %v633 = vpop.permute.xlu0 %632
  %vm635 = vcmask 7168
  %636 = vst.msk [vmem:[%s6] sm:$0xff] %vm635, %v633
  // Predicated region
  $region26: #{tpu_custom_call.1} parent=0 // pred_check
    _
  $region27: #{tpu_custom_call.1} parent=0 // pred_check_branch
    %638 = sbr.rel (0) target = $region29
  $region28: #{tpu_custom_call.1} parent=0 // pred_region
    _
  $region29: #{tpu_custom_call.1} parent=0 // pred_fallthru
    _
  // Predicated region
  $region30: #{tpu_custom_call.1} parent=0 // pred_check
    _
  $region31: #{tpu_custom_call.1} parent=0 // pred_check_branch
    %640 = sbr.rel (0) target = $region33
  $region32: #{tpu_custom_call.1} parent=0 // pred_region
    _
  $region33: #{tpu_custom_call.1} parent=0 // pred_fallthru
    _

// kernel: tpu_custom_call.1
$region0: #{tpu_custom_call.1}
  #allocation0 [shape = 'u32[]', space=smem, size = 0x4, offset = 0x4, fixed_abs, tag = 'smem constant byte address 0x4 - core index']
  #allocation1 [shape = 'u32[144,128]{1,0:T(1,128)}', space=vmem, size = 0x12000, scoped, tag = 'internal scratch']
  #allocation2 [shape = 's32[1]{0:T(128)S(6)}', space=smem, size = 0x200, scoped, tag = 'scoped memory for tpu_custom_call.1']
  %s0 = inlined_call_operand.<no memory space> [shape: s32[1], index: 0, kind: input, shape index: {}]
  %s1 = inlined_call_operand.vmem [shape: f32[8,100], index: 1, kind: input, shape index: {}]
  %s2 = inlined_call_operand.vmem [shape: f32[100,96], index: 2, kind: input, shape index: {}]
  %s3 = inlined_call_operand.vmem [shape: f32[192,96], index: 3, kind: input, shape index: {}]
  %s4 = inlined_call_operand.vmem [shape: f32[96,14], index: 4, kind: input, shape index: {}]
  %s5 = inlined_call_operand.vmem [shape: f32[4,96], index: 5, kind: input, shape index: {}]
  %s6 = inlined_call_operand.vmem [shape: f32[8,1], index: 6, kind: output, shape index: {}]
  %s7 = sld [smem:[#allocation0]]
  $region34: #{tpu_custom_call.1} parent=0
    _
  %s9 = ssub.s32 1, %s7
  %s10 = scalar_select 0, %s9, %s7
  %11 = sst [smem:[#allocation2]] %s0
  // Predicated region
  $region2: #{tpu_custom_call.1} parent=0 // pred_check
    _
  $region3: #{tpu_custom_call.1} parent=0 // pred_check_branch
    %13 = sbr.rel (0) target = $region5
  $region4: #{tpu_custom_call.1} parent=0 // pred_region
    _
  $region5: #{tpu_custom_call.1} parent=0 // pred_fallthru
    _
  // Predicated region
  $region6: #{tpu_custom_call.1} parent=0 // pred_check
    _
  $region7: #{tpu_custom_call.1} parent=0 // pred_check_branch
    %15 = sbr.rel (0) target = $region9
  $region8: #{tpu_custom_call.1} parent=0 // pred_region
    _
  $region9: #{tpu_custom_call.1} parent=0 // pred_fallthru
    _
  // Predicated region
  $region10: #{tpu_custom_call.1} parent=0 // pred_check
    _
  $region11: #{tpu_custom_call.1} parent=0 // pred_check_branch
    %17 = sbr.rel (0) target = $region13
  $region12: #{tpu_custom_call.1} parent=0 // pred_region
    _
  $region13: #{tpu_custom_call.1} parent=0 // pred_fallthru
    _
  // Predicated region
  $region14: #{tpu_custom_call.1} parent=0 // pred_check
    _
  $region15: #{tpu_custom_call.1} parent=0 // pred_check_branch
    %19 = sbr.rel (0) target = $region17
  $region16: #{tpu_custom_call.1} parent=0 // pred_region
    _
  $region17: #{tpu_custom_call.1} parent=0 // pred_fallthru
    _
  // Predicated region
  $region18: #{tpu_custom_call.1} parent=0 // pred_check
    _
  $region19: #{tpu_custom_call.1} parent=0 // pred_check_branch
    %21 = sbr.rel (0) target = $region21
  $region20: #{tpu_custom_call.1} parent=0 // pred_region
    _
  $region21: #{tpu_custom_call.1} parent=0 // pred_fallthru
    _
  // Predicated region
  $region22: #{tpu_custom_call.1} parent=0 // pred_check
    _
  $region23: #{tpu_custom_call.1} parent=0 // pred_check_branch
    %23 = sbr.rel (0) target = $region25
  $region24: #{tpu_custom_call.1} parent=0 // pred_region
    _
  $region25: #{tpu_custom_call.1} parent=0 // pred_fallthru
    _
  %v24 = vld [vmem:[%s1] sm:$0xff]
  %s25 = sld [smem:[#allocation2]]
  %s26 = scvt.s32.f32 %s25
  %v27 = vstv %s26
  %v28 = vrcp.pop %v27
  %s29 = vtos %v28
  %v30 = vlaneseq
  %v31 = vshrl.u32 %v30, 7
  %v32 = vstv %s25
  %vm33 = vcmp.lt.s32.totalorder %v31, %v32
  %v34 = vsel %vm33, 1, 0
  %v35 = vcvt.s32.f32 %v34
  %v36 = vmul.f32 %v24, %v35
  %vm37 = vcmask 818176
  %v38 = vsel %vm37, %v36, 0.0
  %v39 = vrot.slane %v38, 4
  %v40 = vadd.f32 %v38, %v39
  %v41 = vrot.slane %v40, 2
  %v42 = vadd.f32 %v40, %v41
  %v43 = vrot.slane %v42, 1
  %v44 = vadd.f32 %v42, %v43
  %v45 = vstv %s29
  %v46 = vmul.f32 %v44, %v45
  %v47 = vmul.f32 %v36, %v24
  %v48 = vsel %vm37, %v47, 0.0
  %v49 = vrot.slane %v48, 4
  %v50 = vadd.f32 %v48, %v49
  %v51 = vrot.slane %v50, 2
  %v52 = vadd.f32 %v50, %v51
  %v53 = vrot.slane %v52, 1
  %v54 = vadd.f32 %v52, %v53
  %v55 = vmul.f32 %v54, %v45
  %v56 = vmul.f32 %v46, %v46
  %v57 = vsub.f32 %v55, %v56
  %v58 = vsub.f32 %v24, %v46
  %v59 = vadd.f32 %v57, 1e-05
  %v60 = vrsqrt.pop %v59
  %v61 = vmul.f32 %v58, %v60
  %v62 = vld [vmem:[%s2] sm:$0xff]
  %v63 = vld [vmem:[%s2 + $0x8] sm:$0xff]
  %v64 = vld [vmem:[%s2 + $0x10] sm:$0xff]
  %v65 = vld [vmem:[%s2 + $0x18] sm:$0xff]
  %v66 = vld [vmem:[%s2 + $0x20] sm:$0xff]
  %v67 = vld [vmem:[%s2 + $0x28] sm:$0xff]
  %v68 = vld [vmem:[%s2 + $0x30] sm:$0xff]
  %v69 = vld [vmem:[%s2 + $0x38] sm:$0xff]
  %v70 = vld [vmem:[%s2 + $0x40] sm:$0xff]
  %v71 = vld [vmem:[%s2 + $0x48] sm:$0xff]
  %v72 = vld [vmem:[%s2 + $0x50] sm:$0xff]
  %v73 = vld [vmem:[%s2 + $0x58] sm:$0xff]
  %v74 = vld [vmem:[%s2 + $0x60] sm:$0xf]
  %v75 = vld [vmem:[%s5] sm:$0x1]
  %v76 = vlaneseq
  %v77 = vshrl.u32 %v76, 7
  %v78 = vsub.s32 0, %v77
  %v79 = vrot.slane %v75, %v78
  %v81 = vsel %vm37, %v61, 0
  %vm83 = vcmask 1043456
  %v85 = vsel %vm83, %v74, 0
  %87 = vmatprep.subr.mxu0 0.0
  %88 = vmatpush1.msra.mxu0 %v62
  %89 = vmatprep.subr.mxu0 0.0
  %90 = vmatpush1.msra.mxu0 %v63
  %91 = vmatprep.subr.mxu0 0.0
  %92 = vmatpush1.msra.mxu0 %v64
  %93 = vmatprep.subr.mxu0 0.0
  %94 = vmatpush1.msra.mxu0 %v65
  %95 = vmatprep.subr.mxu0 0.0
  %96 = vmatpush1.msra.mxu0 %v66
  %97 = vmatprep.subr.mxu0 0.0
  %98 = vmatpush1.msra.mxu0 %v67
  %99 = vmatprep.subr.mxu0 0.0
  %100 = vmatpush1.msra.mxu0 %v68
  %101 = vmatprep.subr.mxu0 0.0
  %102 = vmatpush1.msra.mxu0 %v69
  %103 = vmatprep.subr.mxu0 0.0
  %104 = vmatpush1.msra.mxu0 %v70
  %105 = vmatprep.subr.mxu0 0.0
  %106 = vmatpush1.msra.mxu0 %v71
  %107 = vmatprep.subr.mxu0 0.0
  %108 = vmatpush1.msra.mxu0 %v72
  %109 = vmatprep.subr.mxu0 0.0
  %110 = vmatpush1.msra.mxu0 %v73
  %111 = vmatprep.subr.mxu0 0.0
  %112 = vmatpush1.msra.mxu0 %v85
  %113 = vmatprep.subr.mxu0 0.0
  %114 = vmatpush1.msra.mxu0 0.0
  %115 = vmatprep.subr.mxu0 0.0
  %116 = vmatpush1.msra.mxu0 0.0
  %117 = vmatprep.subr.mxu0 0.0
  %118 = vmatpush1.msra.mxu0 0.0
  %119 = vmatprep.subr.mxu0 0.0
  %120 = vmatpush1.msra.mxu0 0.0
  %121 = vmatprep.subr.mxu0 0.0
  %122 = vmatpush1.msra.mxu0 0.0
  %123 = vmatprep.subr.mxu0 0.0
  %124 = vmatpush1.msra.mxu0 0.0
  %125 = vmatprep.subr.mxu0 0.0
  %126 = vmatpush1.msra.mxu0 0.0
  %127 = vmatprep.subr.mxu0 0.0
  %128 = vmatpush1.msra.mxu0 0.0
  %129 = vmatprep.subr.mxu0 0.0
  %130 = vmatpush1.msra.mxu0 0.0
  %131 = vmatprep.subr.mxu0 0.0
  %132 = vmatpush1.msra.mxu0 0.0
  %133 = vmatprep.subr.mxu0 0.0
  %134 = vmatpush1.msra.mxu0 0.0
  %135 = vmatprep.subr.mxu0 0.0
  %136 = vmatpush1.msra.mxu0 0.0
  %137 = vmatprep.subr.mxu0 0.0
  %138 = vmatpush1.msra.mxu0 0.0
  %139 = vmatprep.subr.mxu0 0.0
  %140 = vmatpush1.msra.mxu0 0.0
  %141 = vmatprep.subr.mxu0 0.0
  %142 = vmatpush1.msra.mxu0 0.0
  %143 = vmatprep.subr.mxu0 0.0
  %144 = vmatpush1.msra.mxu0 0.0
  %145 = vmatprep.subr.mxu0 0.0
  %146 = vmatpush1.msra.mxu0 0.0
  %147 = vmatprep.subr.mxu0 0.0
  %148 = vmatpush1.msra.mxu0 0.0
  %149 = vmatprep.subr.mxu0 0.0
  %150 = vmatpush1.msra.mxu0 0.0
  %151 = vmatprep.mubr.f32.mxu0 0.0
  %152 = vmatmul.mubr.f32.gmra.mrb[0].mxu0 %v81
  %v153 = vpop.f32.mrb[0].mxu0
  %v154 = vadd.f32 %v79, %v153
  %v155 = vpop.f32.mrb[0].mxu0
  %156 = vdwg.mxu0
  %v157 = vmul.f32 %v154, 0.5
  %v158 = vmul.f32 %v154, 0.044715
  %v159 = vmul.f32 %v158, %v154
  %v160 = vmul.f32 %v159, %v154
  %v161 = vadd.f32 %v154, %v160
  %v162 = vmul.f32 %v161, 0.7978846
  %v163 = vtanh.pop %v162
  %v164 = vadd.f32 %v163, 1.0
  %v165 = vmul.f32 %v157, %v164
  %v166 = vmul.f32 %v165, %v35
  %vm167 = vcmask 785408
  %v168 = vsel %vm167, %v166, 0.0
  %v169 = vrot.slane %v168, 4
  %v170 = vadd.f32 %v168, %v169
  %v171 = vrot.slane %v170, 2
  %v172 = vadd.f32 %v170, %v171
  %v173 = vrot.slane %v172, 1
  %v174 = vadd.f32 %v172, %v173
  %v175 = vmul.f32 %v174, %v45
  %v176 = vmul.f32 %v166, %v165
  %v177 = vsel %vm167, %v176, 0.0
  %v178 = vrot.slane %v177, 4
  %v179 = vadd.f32 %v177, %v178
  %v180 = vrot.slane %v179, 2
  %v181 = vadd.f32 %v179, %v180
  %v182 = vrot.slane %v181, 1
  %v183 = vadd.f32 %v181, %v182
  %v184 = vmul.f32 %v183, %v45
  %v185 = vmul.f32 %v175, %v175
  %v186 = vsub.f32 %v184, %v185
  %v187 = vsub.f32 %v165, %v175
  %v188 = vadd.f32 %v186, 1e-05
  %v189 = vrsqrt.pop %v188
  %v190 = vmul.f32 %v187, %v189
  %v191 = vld [vmem:[%s3] sm:$0xff]
  %v192 = vld [vmem:[%s3 + $0x8] sm:$0xff]
  %v193 = vld [vmem:[%s3 + $0x10] sm:$0xff]
  %v194 = vld [vmem:[%s3 + $0x18] sm:$0xff]
  %v195 = vld [vmem:[%s3 + $0x20] sm:$0xff]
  %v196 = vld [vmem:[%s3 + $0x28] sm:$0xff]
  %v197 = vld [vmem:[%s3 + $0x30] sm:$0xff]
  %v198 = vld [vmem:[%s3 + $0x38] sm:$0xff]
  %v199 = vld [vmem:[%s3 + $0x40] sm:$0xff]
  %v200 = vld [vmem:[%s3 + $0x48] sm:$0xff]
  %v201 = vld [vmem:[%s3 + $0x50] sm:$0xff]
  %v202 = vld [vmem:[%s3 + $0x58] sm:$0xff]
  %v203 = vld [vmem:[%s5 + $0x1] sm:$0x1]
  %v204 = vlaneseq
  %v205 = vshrl.u32 %v204, 7
  %v206 = vsub.s32 0, %v205
  %v207 = vrot.slane %v203, %v206
  %v209 = vsel %vm167, %v190, 0
  %211 = vmatprep.subr.mxu0 0.0
  %212 = vmatpush1.msra.mxu0 %v191
  %213 = vmatprep.subr.mxu0 0.0
  %214 = vmatpush1.msra.mxu0 %v192
  %215 = vmatprep.subr.mxu0 0.0
  %216 = vmatpush1.msra.mxu0 %v193
  %217 = vmatprep.subr.mxu0 0.0
  %218 = vmatpush1.msra.mxu0 %v194
  %219 = vmatprep.subr.mxu0 0.0
  %220 = vmatpush1.msra.mxu0 %v195
  %221 = vmatprep.subr.mxu0 0.0
  %222 = vmatpush1.msra.mxu0 %v196
  %223 = vmatprep.subr.mxu0 0.0
  %224 = vmatpush1.msra.mxu0 %v197
  %225 = vmatprep.subr.mxu0 0.0
  %226 = vmatpush1.msra.mxu0 %v198
  %227 = vmatprep.subr.mxu0 0.0
  %228 = vmatpush1.msra.mxu0 %v199
  %229 = vmatprep.subr.mxu0 0.0
  %230 = vmatpush1.msra.mxu0 %v200
  %231 = vmatprep.subr.mxu0 0.0
  %232 = vmatpush1.msra.mxu0 %v201
  %233 = vmatprep.subr.mxu0 0.0
  %234 = vmatpush1.msra.mxu0 %v202
  %235 = vmatprep.subr.mxu0 0.0
  %236 = vmatpush1.msra.mxu0 0.0
  %237 = vmatprep.subr.mxu0 0.0
  %238 = vmatpush1.msra.mxu0 0.0
  %239 = vmatprep.subr.mxu0 0.0
  %240 = vmatpush1.msra.mxu0 0.0
  %241 = vmatprep.subr.mxu0 0.0
  %242 = vmatpush1.msra.mxu0 0.0
  %243 = vmatprep.subr.mxu0 0.0
  %244 = vmatpush1.msra.mxu0 0.0
  %245 = vmatprep.subr.mxu0 0.0
  %246 = vmatpush1.msra.mxu0 0.0
  %247 = vmatprep.subr.mxu0 0.0
  %248 = vmatpush1.msra.mxu0 0.0
  %249 = vmatprep.subr.mxu0 0.0
  %250 = vmatpush1.msra.mxu0 0.0
  %251 = vmatprep.subr.mxu0 0.0
  %252 = vmatpush1.msra.mxu0 0.0
  %253 = vmatprep.subr.mxu0 0.0
  %254 = vmatpush1.msra.mxu0 0.0
  %255 = vmatprep.subr.mxu0 0.0
  %256 = vmatpush1.msra.mxu0 0.0
  %257 = vmatprep.subr.mxu0 0.0
  %258 = vmatpush1.msra.mxu0 0.0
  %259 = vmatprep.subr.mxu0 0.0
  %260 = vmatpush1.msra.mxu0 0.0
  %261 = vmatprep.subr.mxu0 0.0
  %262 = vmatpush1.msra.mxu0 0.0
  %263 = vmatprep.subr.mxu0 0.0
  %264 = vmatpush1.msra.mxu0 0.0
  %265 = vmatprep.subr.mxu0 0.0
  %266 = vmatpush1.msra.mxu0 0.0
  %267 = vmatprep.subr.mxu0 0.0
  %268 = vmatpush1.msra.mxu0 0.0
  %269 = vmatprep.subr.mxu0 0.0
  %270 = vmatpush1.msra.mxu0 0.0
  %271 = vmatprep.subr.mxu0 0.0
  %272 = vmatpush1.msra.mxu0 0.0
  %273 = vmatprep.subr.mxu0 0.0
  %274 = vmatpush1.msra.mxu0 0.0
  %275 = vmatprep.mubr.f32.mxu0 0.0
  %276 = vmatmul.mubr.f32.gmra.mrb[0].mxu0 %v209
  %v277 = vpop.f32.mrb[0].mxu0
  %v278 = vadd.f32 %v207, %v277
  %v279 = vpop.f32.mrb[0].mxu0
  %280 = vdwg.mxu0
  %v281 = vmul.f32 %v278, 0.5
  %v282 = vmul.f32 %v278, 0.044715
  %v283 = vmul.f32 %v282, %v278
  %v284 = vmul.f32 %v283, %v278
  %v285 = vadd.f32 %v278, %v284
  %v286 = vmul.f32 %v285, 0.7978846
  %v287 = vtanh.pop %v286
  %v288 = vadd.f32 %v287, 1.0
  %v289 = vmul.f32 %v281, %v288
  %v290 = vmul.f32 %v289, %v35
  %v291 = vsel %vm167, %v290, 0.0
  %v292 = vrot.slane %v291, 4
  %v293 = vadd.f32 %v291, %v292
  %v294 = vrot.slane %v293, 2
  %v295 = vadd.f32 %v293, %v294
  %v296 = vrot.slane %v295, 1
  %v297 = vadd.f32 %v295, %v296
  %v298 = vmul.f32 %v297, %v45
  %v299 = vmul.f32 %v290, %v289
  %v300 = vsel %vm167, %v299, 0.0
  %v301 = vrot.slane %v300, 4
  %v302 = vadd.f32 %v300, %v301
  %v303 = vrot.slane %v302, 2
  %v304 = vadd.f32 %v302, %v303
  %v305 = vrot.slane %v304, 1
  %v306 = vadd.f32 %v304, %v305
  %v307 = vmul.f32 %v306, %v45
  %v308 = vmul.f32 %v298, %v298
  %v309 = vsub.f32 %v307, %v308
  %v310 = vsub.f32 %v289, %v298
  %v311 = vadd.f32 %v309, 1e-05
  %v312 = vrsqrt.pop %v311
  %v313 = vmul.f32 %v310, %v312
  %v314 = vld [vmem:[%s3 + $0x60] sm:$0xff]
  %v315 = vld [vmem:[%s3 + $0x68] sm:$0xff]
  %v316 = vld [vmem:[%s3 + $0x70] sm:$0xff]
  %v317 = vld [vmem:[%s3 + $0x78] sm:$0xff]
  %v318 = vld [vmem:[%s3 + $0x80] sm:$0xff]
  %v319 = vld [vmem:[%s3 + $0x88] sm:$0xff]
  %v320 = vld [vmem:[%s3 + $0x90] sm:$0xff]
  %v321 = vld [vmem:[%s3 + $0x98] sm:$0xff]
  %v322 = vld [vmem:[%s3 + $0xa0] sm:$0xff]
  %v323 = vld [vmem:[%s3 + $0xa8] sm:$0xff]
  %v324 = vld [vmem:[%s3 + $0xb0] sm:$0xff]
  %v325 = vld [vmem:[%s3 + $0xb8] sm:$0xff]
  %v326 = vld [vmem:[%s5 + $0x2] sm:$0x1]
  %v327 = vlaneseq
  %v328 = vshrl.u32 %v327, 7
  %v329 = vsub.s32 0, %v328
  %v330 = vrot.slane %v326, %v329
  %v332 = vsel %vm167, %v313, 0
  %334 = vmatprep.subr.mxu0 0.0
  %335 = vmatpush1.msra.mxu0 %v314
  %336 = vmatprep.subr.mxu0 0.0
  %337 = vmatpush1.msra.mxu0 %v315
  %338 = vmatprep.subr.mxu0 0.0
  %339 = vmatpush1.msra.mxu0 %v316
  %340 = vmatprep.subr.mxu0 0.0
  %341 = vmatpush1.msra.mxu0 %v317
  %342 = vmatprep.subr.mxu0 0.0
  %343 = vmatpush1.msra.mxu0 %v318
  %344 = vmatprep.subr.mxu0 0.0
  %345 = vmatpush1.msra.mxu0 %v319
  %346 = vmatprep.subr.mxu0 0.0
  %347 = vmatpush1.msra.mxu0 %v320
  %348 = vmatprep.subr.mxu0 0.0
  %349 = vmatpush1.msra.mxu0 %v321
  %350 = vmatprep.subr.mxu0 0.0
  %351 = vmatpush1.msra.mxu0 %v322
  %352 = vmatprep.subr.mxu0 0.0
  %353 = vmatpush1.msra.mxu0 %v323
  %354 = vmatprep.subr.mxu0 0.0
  %355 = vmatpush1.msra.mxu0 %v324
  %356 = vmatprep.subr.mxu0 0.0
  %357 = vmatpush1.msra.mxu0 %v325
  %358 = vmatprep.subr.mxu0 0.0
  %359 = vmatpush1.msra.mxu0 0.0
  %360 = vmatprep.subr.mxu0 0.0
  %361 = vmatpush1.msra.mxu0 0.0
  %362 = vmatprep.subr.mxu0 0.0
  %363 = vmatpush1.msra.mxu0 0.0
  %364 = vmatprep.subr.mxu0 0.0
  %365 = vmatpush1.msra.mxu0 0.0
  %366 = vmatprep.subr.mxu0 0.0
  %367 = vmatpush1.msra.mxu0 0.0
  %368 = vmatprep.subr.mxu0 0.0
  %369 = vmatpush1.msra.mxu0 0.0
  %370 = vmatprep.subr.mxu0 0.0
  %371 = vmatpush1.msra.mxu0 0.0
  %372 = vmatprep.subr.mxu0 0.0
  %373 = vmatpush1.msra.mxu0 0.0
  %374 = vmatprep.subr.mxu0 0.0
  %375 = vmatpush1.msra.mxu0 0.0
  %376 = vmatprep.subr.mxu0 0.0
  %377 = vmatpush1.msra.mxu0 0.0
  %378 = vmatprep.subr.mxu0 0.0
  %379 = vmatpush1.msra.mxu0 0.0
  %380 = vmatprep.subr.mxu0 0.0
  %381 = vmatpush1.msra.mxu0 0.0
  %382 = vmatprep.subr.mxu0 0.0
  %383 = vmatpush1.msra.mxu0 0.0
  %384 = vmatprep.subr.mxu0 0.0
  %385 = vmatpush1.msra.mxu0 0.0
  %386 = vmatprep.subr.mxu0 0.0
  %387 = vmatpush1.msra.mxu0 0.0
  %388 = vmatprep.subr.mxu0 0.0
  %389 = vmatpush1.msra.mxu0 0.0
  %390 = vmatprep.subr.mxu0 0.0
  %391 = vmatpush1.msra.mxu0 0.0
  %392 = vmatprep.subr.mxu0 0.0
  %393 = vmatpush1.msra.mxu0 0.0
  %394 = vmatprep.subr.mxu0 0.0
  %395 = vmatpush1.msra.mxu0 0.0
  %396 = vmatprep.subr.mxu0 0.0
  %397 = vmatpush1.msra.mxu0 0.0
  %398 = vmatprep.mubr.f32.mxu0 0.0
  %399 = vmatmul.mubr.f32.gmra.mrb[0].mxu0 %v332
  %v400 = vpop.f32.mrb[0].mxu0
  %v401 = vadd.f32 %v330, %v400
  %v402 = vpop.f32.mrb[0].mxu0
  %403 = vdwg.mxu0
  %v404 = vmul.f32 %v401, 0.5
  %v405 = vmul.f32 %v401, 0.044715
  %v406 = vmul.f32 %v405, %v401
  %v407 = vmul.f32 %v406, %v401
  %v408 = vadd.f32 %v401, %v407
  %v409 = vmul.f32 %v408, 0.7978846
  %v410 = vtanh.pop %v409
  %v411 = vadd.f32 %v410, 1.0
  %v412 = vmul.f32 %v404, %v411
  %v413 = vmul.f32 %v412, %v35
  %v414 = vsel %vm167, %v413, 0.0
  %v415 = vrot.slane %v414, 4
  %v416 = vadd.f32 %v414, %v415
  %v417 = vrot.slane %v416, 2
  %v418 = vadd.f32 %v416, %v417
  %v419 = vrot.slane %v418, 1
  %v420 = vadd.f32 %v418, %v419
  %v421 = vmul.f32 %v420, %v45
  %v422 = vmul.f32 %v413, %v412
  %v423 = vsel %vm167, %v422, 0.0
  %v424 = vrot.slane %v423, 4
  %v425 = vadd.f32 %v423, %v424
  %v426 = vrot.slane %v425, 2
  %v427 = vadd.f32 %v425, %v426
  %v428 = vrot.slane %v427, 1
  %v429 = vadd.f32 %v427, %v428
  %v430 = vmul.f32 %v429, %v45
  %v431 = vmul.f32 %v421, %v421
  %v432 = vsub.f32 %v430, %v431
  %v433 = vsub.f32 %v412, %v421
  %v434 = vadd.f32 %v432, 1e-05
  %v435 = vrsqrt.pop %v434
  %v436 = vmul.f32 %v433, %v435
  %v437 = vld [vmem:[%s4] sm:$0xff]
  %v438 = vld [vmem:[%s4 + $0x8] sm:$0xff]
  %v439 = vld [vmem:[%s4 + $0x10] sm:$0xff]
  %v440 = vld [vmem:[%s4 + $0x18] sm:$0xff]
  %v441 = vld [vmem:[%s4 + $0x20] sm:$0xff]
  %v442 = vld [vmem:[%s4 + $0x28] sm:$0xff]
  %v443 = vld [vmem:[%s4 + $0x30] sm:$0xff]
  %v444 = vld [vmem:[%s4 + $0x38] sm:$0xff]
  %v445 = vld [vmem:[%s4 + $0x40] sm:$0xff]
  %v446 = vld [vmem:[%s4 + $0x48] sm:$0xff]
  %v447 = vld [vmem:[%s4 + $0x50] sm:$0xff]
  %v448 = vld [vmem:[%s4 + $0x58] sm:$0xff]
  %v449 = vld [vmem:[%s5 + $0x3] sm:$0x1]
  %v450 = vlaneseq
  %v451 = vshrl.u32 %v450, 7
  %v452 = vsub.s32 0, %v451
  %v453 = vrot.slane %v449, %v452
  %v455 = vsel %vm167, %v436, 0
  %457 = vmatprep.subr.mxu0 0.0
  %458 = vmatpush1.msra.mxu0 %v437
  %459 = vmatprep.subr.mxu0 0.0
  %460 = vmatpush1.msra.mxu0 %v438
  %461 = vmatprep.subr.mxu0 0.0
  %462 = vmatpush1.msra.mxu0 %v439
  %463 = vmatprep.subr.mxu0 0.0
  %464 = vmatpush1.msra.mxu0 %v440
  %465 = vmatprep.subr.mxu0 0.0
  %466 = vmatpush1.msra.mxu0 %v441
  %467 = vmatprep.subr.mxu0 0.0
  %468 = vmatpush1.msra.mxu0 %v442
  %469 = vmatprep.subr.mxu0 0.0
  %470 = vmatpush1.msra.mxu0 %v443
  %471 = vmatprep.subr.mxu0 0.0
  %472 = vmatpush1.msra.mxu0 %v444
  %473 = vmatprep.subr.mxu0 0.0
  %474 = vmatpush1.msra.mxu0 %v445
  %475 = vmatprep.subr.mxu0 0.0
  %476 = vmatpush1.msra.mxu0 %v446
  %477 = vmatprep.subr.mxu0 0.0
  %478 = vmatpush1.msra.mxu0 %v447
  %479 = vmatprep.subr.mxu0 0.0
  %480 = vmatpush1.msra.mxu0 %v448
  %481 = vmatprep.subr.mxu0 0.0
  %482 = vmatpush1.msra.mxu0 0.0
  %483 = vmatprep.subr.mxu0 0.0
  %484 = vmatpush1.msra.mxu0 0.0
  %485 = vmatprep.subr.mxu0 0.0
  %486 = vmatpush1.msra.mxu0 0.0
  %487 = vmatprep.subr.mxu0 0.0
  %488 = vmatpush1.msra.mxu0 0.0
  %489 = vmatprep.subr.mxu0 0.0
  %490 = vmatpush1.msra.mxu0 0.0
  %491 = vmatprep.subr.mxu0 0.0
  %492 = vmatpush1.msra.mxu0 0.0
  %493 = vmatprep.subr.mxu0 0.0
  %494 = vmatpush1.msra.mxu0 0.0
  %495 = vmatprep.subr.mxu0 0.0
  %496 = vmatpush1.msra.mxu0 0.0
  %497 = vmatprep.subr.mxu0 0.0
  %498 = vmatpush1.msra.mxu0 0.0
  %499 = vmatprep.subr.mxu0 0.0
  %500 = vmatpush1.msra.mxu0 0.0
  %501 = vmatprep.subr.mxu0 0.0
  %502 = vmatpush1.msra.mxu0 0.0
  %503 = vmatprep.subr.mxu0 0.0
  %504 = vmatpush1.msra.mxu0 0.0
  %505 = vmatprep.subr.mxu0 0.0
  %506 = vmatpush1.msra.mxu0 0.0
  %507 = vmatprep.subr.mxu0 0.0
  %508 = vmatpush1.msra.mxu0 0.0
  %509 = vmatprep.subr.mxu0 0.0
  %510 = vmatpush1.msra.mxu0 0.0
  %511 = vmatprep.subr.mxu0 0.0
  %512 = vmatpush1.msra.mxu0 0.0
  %513 = vmatprep.subr.mxu0 0.0
  %514 = vmatpush1.msra.mxu0 0.0
  %515 = vmatprep.subr.mxu0 0.0
  %516 = vmatpush1.msra.mxu0 0.0
  %517 = vmatprep.subr.mxu0 0.0
  %518 = vmatpush1.msra.mxu0 0.0
  %519 = vmatprep.subr.mxu0 0.0
  %520 = vmatpush1.msra.mxu0 0.0
  %521 = vmatprep.mubr.f32.mxu0 0.0
  %522 = vmatmul.mubr.f32.gmra.mrb[0].mxu0 %v455
  %v523 = vpop.f32.mrb[0].mxu0
  %v524 = vadd.f32 %v453, %v523
  %v525 = vpop.f32.mrb[0].mxu0
  %526 = vdwg.mxu0
  %v527 = vmul.f32 %v524, %v35
  %vm528 = vcmask 113728
  %v529 = vsel %vm528, %v527, 0.0
  %v530 = vrot.slane %v529, 4
  %v531 = vadd.f32 %v529, %v530
  %v532 = vrot.slane %v531, 2
  %v533 = vadd.f32 %v531, %v532
  %v534 = vrot.slane %v533, 1
  %v535 = vadd.f32 %v533, %v534
  %v536 = vmul.f32 %v535, %v45
  %v537 = vrcp.pop %v24
  %v538 = vmul.f32 1.0, %v537
  %540 = vrot.lane.b32.xlu0 %v536, 89
  %v541 = vpop.permute.xlu0 %540
  %v543 = vsub.f32 %v24, %v541
  %v544 = vrcp.pop %v543
  %v545 = vmul.f32 1.0, %v544
  %547 = vrot.lane.b32.xlu0 %v538, 32
  %v548 = vpop.permute.xlu0 %547
  %v550 = vmul.f32 %v524, %v548
  %552 = vrot.lane.b32.xlu0 %v550, 127
  %v553 = vpop.permute.xlu0 %552
  %v555 = vadd.f32 %v524, %v553
  %557 = vrot.lane.b32.xlu0 %v545, 33
  %v558 = vpop.permute.xlu0 %557
  %v560 = vmul.f32 %v524, %v558
  %562 = vrot.lane.b32.xlu0 %v560, 126
  %v563 = vpop.permute.xlu0 %562
  %v565 = vadd.f32 %v555, %v563
  %567 = vrot.lane.b32.xlu0 %v24, 120
  %v568 = vpop.permute.xlu0 %567
  %v570 = vmul.f32 %v24, %v568
  %v571 = vlog2.pop %v570
  %v572 = vmul.f32 %v571, 0.6931472
  %574 = vrot.lane.b32.xlu0 %v572, 41
  %v575 = vpop.permute.xlu0 %574
  %v577 = vmul.f32 %v524, %v575
  %579 = vrot.lane.b32.xlu0 %v577, 125
  %v580 = vpop.permute.xlu0 %579
  %v582 = vadd.f32 %v565, %v580
  %584 = vrot.lane.b32.xlu0 %v582, 90
  %v585 = vpop.permute.xlu0 %584
  %v587 = vmul.f32 %v24, %v585
  %588 = vrot.lane.b32.xlu0 %v538, 36
  %v589 = vpop.permute.xlu0 %588
  %v591 = vmul.f32 %v524, %v589
  %593 = vrot.lane.b32.xlu0 %v591, 127
  %v594 = vpop.permute.xlu0 %593
  %v596 = vadd.f32 %v524, %v594
  %597 = vrot.lane.b32.xlu0 %v545, 37
  %v598 = vpop.permute.xlu0 %597
  %v600 = vmul.f32 %v524, %v598
  %602 = vrot.lane.b32.xlu0 %v600, 126
  %v603 = vpop.permute.xlu0 %602
  %v605 = vadd.f32 %v596, %v603
  %606 = vrot.lane.b32.xlu0 %v572, 44
  %v607 = vpop.permute.xlu0 %606
  %v609 = vmul.f32 %v524, %v607
  %611 = vrot.lane.b32.xlu0 %v609, 125
  %v612 = vpop.permute.xlu0 %611
  %v614 = vadd.f32 %v605, %v612
  %616 = vrot.lane.b32.xlu0 %v614, 87
  %v617 = vpop.permute.xlu0 %616
  %v619 = vmul.f32 %v24, %v617
  %620 = vrot.lane.b32.xlu0 %v536, 83
  %v621 = vpop.permute.xlu0 %620
  %v623 = vmul.f32 %v24, %v621
  %625 = vrot.lane.b32.xlu0 %v623, 36
  %v626 = vpop.permute.xlu0 %625
  %vm628 = vcmask 39936
  %v629 = vsel %vm628, %v626, 0.0
  %630 = vadd.xlane.f32.xlu0 %v629
  %v631 = vpop.xlane.xlu0 %630
  %633 = vrot.lane.b32.xlu0 %v619, 127
  %v634 = vpop.permute.xlu0 %633
  %v636 = vadd.f32 %v587, %v634
  %637 = vrot.lane.b32.xlu0 %v24, 127
  %v638 = vpop.permute.xlu0 %637
  %v640 = vmul.f32 %v24, %v638
  %v641 = vmul.f32 %v640, %v631
  %v642 = vadd.f32 %v636, %v641
  %644 = vrot.lane.b32.xlu0 %v642, 38
  %v645 = vpop.permute.xlu0 %644
  %vm647 = vcmask 7168
  %648 = vst.msk [vmem:[%s6] sm:$0xff] %vm647, %v645
  // Predicated region
  $region26: #{tpu_custom_call.1} parent=0 // pred_check
    _
  $region27: #{tpu_custom_call.1} parent=0 // pred_check_branch
    %650 = sbr.rel (0) target = $region29
  $region28: #{tpu_custom_call.1} parent=0 // pred_region
    _
  $region29: #{tpu_custom_call.1} parent=0 // pred_fallthru
    _
  // Predicated region
  $region30: #{tpu_custom_call.1} parent=0 // pred_check
    _
  $region31: #{tpu_custom_call.1} parent=0 // pred_check_branch
    %652 = sbr.rel (0) target = $region33
  $region32: #{tpu_custom_call.1} parent=0 // pred_region
    _
  $region33: #{tpu_custom_call.1} parent=0 // pred_fallthru
    _

</llo_original>
